<compile_context>
chip_gen: v6e
topology: v6e:2x2x1
jax: 0.10.0
libtpu: 0.0.40
codegen_flags: <defaults>
</compile_context>

<pallas_src>
import jax
import jax.numpy as jnp
from jax import lax
from jax.experimental import pallas as pl
from jax.experimental.pallas import tpu as pltpu

NEG_SLOPE = 0.2
BN_EPS = 1e-5
# On v6e/v7x this can be set to jnp.bfloat16 for MXU-native matmul throughput
# (BN statistics stay in f32 either way); kept f32 here for tight verification.
MATMUL_DTYPE = jnp.float32


# ----------------------------------------------------------------------------
# Fused SepDown kernel:  (im2col -> MXU matmul -> BN -> LeakyReLU) x 2
# ----------------------------------------------------------------------------
def _sepdown_kernel(
    x_ref,                       # (N, H2, W2, Cin)   pooled input (NHWC)
    w1_ref,                      # (9*Cin, Cout)      combined dw1*pw1 weights
    g1_ref, b1_ref,              # (1, Cout)          BN1 gamma / beta
    w2_ref,                      # (9*Cout, Cout)     combined dw2*pw2 weights
    g2_ref, b2_ref,              # (1, Cout)          BN2 gamma / beta
    o_ref,                       # (N*H2*W2, Cout)
    pad1_ref,                    # VMEM (N, H2+2, W2+2, Cin)
    pat1_ref,                    # VMEM (N*H2*W2, 9*Cin)
    pad2_ref,                    # VMEM (N, H2+2, W2+2, Cout)
    pat2_ref,                    # VMEM (N*H2*W2, 9*Cout)
):
    N, H2, W2, Cin = x_ref.shape
    Cout = o_ref.shape[-1]

    def conv_bn_lrelu(x, pad_ref, pat_ref, w_ref, g_ref, b_ref):
        n, hp, wp, c = pad_ref.shape
        h, wd = hp - 2, wp - 2
        m = n * h * wd

        # --- zero-pad: halo-only zeroing (4 border stores), interior once ----
        zrow = jnp.zeros((n, 1, wp, c), jnp.float32)
        zcol = jnp.zeros((n, h, 1, c), jnp.float32)
        pad_ref[:, 0:1, :, :] = zrow
        pad_ref[:, hp - 1:hp, :, :] = zrow
        pad_ref[:, 1:h + 1, 0:1, :] = zcol
        pad_ref[:, 1:h + 1, wp - 1:wp, :] = zcol
        pad_ref[:, 1:h + 1, 1:wd + 1, :] = x

        # --- 9-tap im2col staged in VMEM: columns [k*c, (k+1)*c) = tap k ------
        for k in range(9):
            ky, kx = k // 3, k % 3
            pat_ref[:, k * c:(k + 1) * c] = (
                pad_ref[:, ky:ky + h, kx:kx + wd, :].reshape(m, c))

        # --- depthwise + pointwise as ONE MXU matmul (K = 9*c) ----------------
        y = jnp.dot(pat_ref[...].astype(MATMUL_DTYPE),
                    w_ref[...].astype(MATMUL_DTYPE),
                    preferred_element_type=jnp.float32)          # (m, Cout)

        # --- training-mode BatchNorm (biased batch stats), affine fused -------
        mean = jnp.mean(y, axis=0, keepdims=True)                 # (1, Cout)
        var = jnp.mean(jnp.square(y - mean), axis=0, keepdims=True)
        s = g_ref[...] * lax.rsqrt(var + BN_EPS)                  # scale
        t = b_ref[...] - mean * s                                 # shift
        z = y * s + t
        return jnp.maximum(z, NEG_SLOPE * z)                      # LeakyReLU(0.2)

    a1 = conv_bn_lrelu(x_ref[...], pad1_ref, pat1_ref, w1_ref, g1_ref, b1_ref)
    a1 = a1.reshape(N, H2, W2, Cout)                              # leading-dim split
    o_ref[...] = conv_bn_lrelu(a1, pad2_ref, pat2_ref, w2_ref, g2_ref, b2_ref)


# ----------------------------------------------------------------------------
# Public forward (PyTorch NCHW in / NCHW out)
# ----------------------------------------------------------------------------
def sepdown_forward(params, x_nchw):
    """SepDown forward.  x_nchw: (N, Cin, H, W) -> (N, Cout, H//2, W//2)."""
    x = x_nchw.astype(jnp.float32)
    N, Cin, H, W = x.shape
    assert H % 2 == 0 and W % 2 == 0, "MaxPool2d(2) path requires even H and W"
    H2, W2 = H // 2, W // 2
    Cout = params["pw1_w"].shape[0]
    M = N * H2 * W2

    # MaxPool2d(2) + NCHW -> NHWC relayout done in the wrapper (fused by XLA):
    # the kernel's input DMA is the already-pooled tensor.
    pooled = x.reshape(N, Cin, H2, 2, W2, 2).max(axis=(3, 5))     # (N, Cin, H2, W2)
    x_nhwc = pooled.transpose(0, 2, 3, 1)                         # (N, H2, W2, Cin)

    # Combined depthwise*pointwise weights:
    #   W_comb[(ky*3+kx)*C + c, co] = dw[c, ky, kx] * pw[co, c]
    # Conv biases are intentionally dropped: per-output-channel constants are
    # exactly cancelled by the training-mode BN mean subtraction.
    dw1 = params["dw1_w"].reshape(Cin, 9)                         # [c, k]
    pw1 = params["pw1_w"].reshape(Cout, Cin)                      # [co, c]
    w1c = jnp.einsum("ck,oc->kco", dw1, pw1).reshape(9 * Cin, Cout)
    dw2 = params["dw2_w"].reshape(Cout, 9)
    pw2 = params["pw2_w"].reshape(Cout, Cout)
    w2c = jnp.einsum("ck,oc->kco", dw2, pw2).reshape(9 * Cout, Cout)

    row = lambda v: v.reshape(1, -1).astype(jnp.float32)

    out2d = pl.pallas_call(
        _sepdown_kernel,
        out_shape=jax.ShapeDtypeStruct((M, Cout), jnp.float32),
        scratch_shapes=[
            pltpu.VMEM((N, H2 + 2, W2 + 2, Cin), jnp.float32),    # pad1
            pltpu.VMEM((M, 9 * Cin), jnp.float32),                # im2col 1
            pltpu.VMEM((N, H2 + 2, W2 + 2, Cout), jnp.float32),   # pad2
            pltpu.VMEM((M, 9 * Cout), jnp.float32),               # im2col 2
        ],
        compiler_params=pltpu.CompilerParams(
            vmem_limit_bytes=32 * 1024 * 1024),
    )(x_nhwc.astype(jnp.float32), w1c.astype(jnp.float32),
      row(params["bn1_g"]), row(params["bn1_b"]),
      w2c.astype(jnp.float32),
      row(params["bn2_g"]), row(params["bn2_b"]))

    # (N*H2*W2, Cout) -> NCHW.
    return out2d.reshape(N, H2, W2, Cout).transpose(0, 3, 1, 2)


# ----------------------------------------------------------------------------
# Pure-XLA reference with PyTorch semantics (verification only)
# ----------------------------------------------------------------------------
def sepdown_reference(params, x_nchw):
    x = x_nchw.astype(jnp.float32)
    x = lax.reduce_window(x, -jnp.inf, lax.max,
                          (1, 1, 2, 2), (1, 1, 2, 2), "VALID")

    def dwsep(y, dw_w, dw_b, pw_w, pw_b):
        c = y.shape[1]
        y = lax.conv_general_dilated(
            y, dw_w, (1, 1), ((1, 1), (1, 1)),
            dimension_numbers=("NCHW", "OIHW", "NCHW"),
            feature_group_count=c, precision=lax.Precision.HIGHEST)
        y = y + dw_b.reshape(1, -1, 1, 1)
        y = lax.conv_general_dilated(
            y, pw_w, (1, 1), "VALID",
            dimension_numbers=("NCHW", "OIHW", "NCHW"),
            precision=lax.Precision.HIGHEST)
        return y + pw_b.reshape(1, -1, 1, 1)

    def bn_lrelu(y, g, b):
        mean = jnp.mean(y, axis=(0, 2, 3), keepdims=True)
        var = jnp.mean(jnp.square(y - mean), axis=(0, 2, 3), keepdims=True)
        z = ((y - mean) * lax.rsqrt(var + BN_EPS) * g.reshape(1, -1, 1, 1)
             + b.reshape(1, -1, 1, 1))
        return jnp.maximum(z, NEG_SLOPE * z)

    y = dwsep(x, params["dw1_w"], params["dw1_b"], params["pw1_w"], params["pw1_b"])
    y = bn_lrelu(y, params["bn1_g"], params["bn1_b"])
    y = dwsep(y, params["dw2_w"], params["dw2_b"], params["pw2_w"], params["pw2_b"])
    y = bn_lrelu(y, params["bn2_g"], params["bn2_b"])
    return y


# ----------------------------------------------------------------------------
# Deterministic parameter construction (shapes per SepDown.__init__)
# ----------------------------------------------------------------------------
def init_params(key, inchannels, outchannels):
    ks = jax.random.split(key, 12)

    def nrm(k, shape, std=0.1):
        return std * jax.random.normal(k, shape, dtype=jnp.float32)

    return dict(
        dw1_w=nrm(ks[0], (inchannels, 1, 3, 3)),        # torch depthwise (C,1,3,3)
        dw1_b=nrm(ks[1], (inchannels,), 0.05),
        pw1_w=nrm(ks[2], (outchannels, inchannels, 1, 1)),
        pw1_b=nrm(ks[3], (outchannels,), 0.05),
        bn1_g=1.0 + nrm(ks[4], (outchannels,), 0.02),
        bn1_b=nrm(ks[5], (outchannels,), 0.02),
        dw2_w=nrm(ks[6], (outchannels, 1, 3, 3)),
        dw2_b=nrm(ks[7], (outchannels,), 0.05),
        pw2_w=nrm(ks[8], (outchannels, outchannels, 1, 1)),
        pw2_b=nrm(ks[9], (outchannels,), 0.05),
        bn2_g=1.0 + nrm(ks[10], (outchannels,), 0.02),
        bn2_b=nrm(ks[11], (outchannels,), 0.02),
    )


if __name__ == "__main__":
    key = jax.random.PRNGKey(0)
    k_in, k_par = jax.random.split(key)

    # SepDown(inchannels=4, outchannels=16) on a (2, 4, 16, 16) NCHW input.
    inchannels, outchannels = 4, 16
    x = jax.random.normal(k_in, (2, inchannels, 16, 16), dtype=jnp.float32)
    params = init_params(k_par, inchannels, outchannels)

    out = jax.block_until_ready(jax.jit(sepdown_forward)(params, x))
    assert out.shape == (2, outchannels, 8, 8), out.shape

    # Verify against the plain-XLA reference (tolerance absorbs MXU
    # pass-precision differences between matmul and conv paths).
    ref = jax.block_until_ready(jax.jit(sepdown_reference)(params, x))
    max_err = float(jnp.max(jnp.abs(out - ref)))
    assert jnp.allclose(out, ref, atol=2e-2, rtol=2e-2), f"max_err={max_err}"

    print("KERNEL_OK")
</pallas_src>

<mosaic_0001>
module attributes {stable_mosaic.version = 11 : i64} {
  func.func @_sepdown_kernel(%arg0: memref<2x8x8x4xf32, #tpu.memory_space<vmem>>, %arg1: memref<36x16xf32, #tpu.memory_space<vmem>>, %arg2: memref<1x16xf32, #tpu.memory_space<vmem>>, %arg3: memref<1x16xf32, #tpu.memory_space<vmem>>, %arg4: memref<144x16xf32, #tpu.memory_space<vmem>>, %arg5: memref<1x16xf32, #tpu.memory_space<vmem>>, %arg6: memref<1x16xf32, #tpu.memory_space<vmem>>, %arg7: memref<128x16xf32, #tpu.memory_space<vmem>>, %arg8: memref<2x10x10x4xf32, #tpu.memory_space<vmem>>, %arg9: memref<128x36xf32, #tpu.memory_space<vmem>>, %arg10: memref<2x10x10x16xf32, #tpu.memory_space<vmem>>, %arg11: memref<128x144xf32, #tpu.memory_space<vmem>>) attributes {dimension_semantics = [], scalar_prefetch = 0 : i64, scratch_operands = 4 : i64, tpu.core_type = #tpu.core_type<tc>} {
    %c0 = arith.constant 0 : index
    %c0_0 = arith.constant 0 : index
    %c0_1 = arith.constant 0 : index
    %c0_2 = arith.constant 0 : index
    %0 = vector.load %arg0[%c0, %c0_0, %c0_1, %c0_2] : memref<2x8x8x4xf32, #tpu.memory_space<vmem>>, vector<2x8x8x4xf32>
    %cst = arith.constant 0.000000e+00 : f32
    %1 = vector.broadcast %cst : f32 to vector<2x1x10x4xf32>
    %cst_3 = arith.constant 0.000000e+00 : f32
    %2 = vector.broadcast %cst_3 : f32 to vector<2x8x1x4xf32>
    %c0_4 = arith.constant 0 : index
    %c0_5 = arith.constant 0 : index
    %c0_6 = arith.constant 0 : index
    %c0_7 = arith.constant 0 : index
    %3 = vector.load %arg8[%c0_4, %c0_5, %c0_6, %c0_7] : memref<2x10x10x4xf32, #tpu.memory_space<vmem>>, vector<2x1x10x4xf32>
    tpu.vector_store %arg8[%c0_4, %c0_5, %c0_6, %c0_7], %1 {strides = array<i32>} : memref<2x10x10x4xf32, #tpu.memory_space<vmem>>, vector<2x1x10x4xf32>,
    %c0_8 = arith.constant 0 : index
    %c9 = arith.constant 9 : index
    %c0_9 = arith.constant 0 : index
    %c0_10 = arith.constant 0 : index
    %4 = vector.load %arg8[%c0_8, %c9, %c0_9, %c0_10] : memref<2x10x10x4xf32, #tpu.memory_space<vmem>>, vector<2x1x10x4xf32>
    tpu.vector_store %arg8[%c0_8, %c9, %c0_9, %c0_10], %1 {strides = array<i32>} : memref<2x10x10x4xf32, #tpu.memory_space<vmem>>, vector<2x1x10x4xf32>,
    %c0_11 = arith.constant 0 : index
    %c1 = arith.constant 1 : index
    %c0_12 = arith.constant 0 : index
    %c0_13 = arith.constant 0 : index
    %5 = vector.load %arg8[%c0_11, %c1, %c0_12, %c0_13] : memref<2x10x10x4xf32, #tpu.memory_space<vmem>>, vector<2x8x1x4xf32>
    tpu.vector_store %arg8[%c0_11, %c1, %c0_12, %c0_13], %2 {strides = array<i32>} : memref<2x10x10x4xf32, #tpu.memory_space<vmem>>, vector<2x8x1x4xf32>,
    %c0_14 = arith.constant 0 : index
    %c1_15 = arith.constant 1 : index
    %c9_16 = arith.constant 9 : index
    %c0_17 = arith.constant 0 : index
    %6 = vector.load %arg8[%c0_14, %c1_15, %c9_16, %c0_17] : memref<2x10x10x4xf32, #tpu.memory_space<vmem>>, vector<2x8x1x4xf32>
    tpu.vector_store %arg8[%c0_14, %c1_15, %c9_16, %c0_17], %2 {strides = array<i32>} : memref<2x10x10x4xf32, #tpu.memory_space<vmem>>, vector<2x8x1x4xf32>,
    %c0_18 = arith.constant 0 : index
    %c1_19 = arith.constant 1 : index
    %c1_20 = arith.constant 1 : index
    %c0_21 = arith.constant 0 : index
    %7 = vector.load %arg8[%c0_18, %c1_19, %c1_20, %c0_21] : memref<2x10x10x4xf32, #tpu.memory_space<vmem>>, vector<2x8x8x4xf32>
    tpu.vector_store %arg8[%c0_18, %c1_19, %c1_20, %c0_21], %0 {strides = array<i32>} : memref<2x10x10x4xf32, #tpu.memory_space<vmem>>, vector<2x8x8x4xf32>,
    %c0_22 = arith.constant 0 : index
    %c0_23 = arith.constant 0 : index
    %c0_24 = arith.constant 0 : index
    %c0_25 = arith.constant 0 : index
    %8 = vector.load %arg8[%c0_22, %c0_23, %c0_24, %c0_25] : memref<2x10x10x4xf32, #tpu.memory_space<vmem>>, vector<2x8x8x4xf32>
    %9 = vector.shape_cast %8 : vector<2x8x8x4xf32> to vector<128x4xf32>
    %c0_26 = arith.constant 0 : index
    %c0_27 = arith.constant 0 : index
    %10 = vector.load %arg9[%c0_26, %c0_27] : memref<128x36xf32, #tpu.memory_space<vmem>>, vector<128x4xf32>
    tpu.vector_store %arg9[%c0_26, %c0_27], %9 {strides = array<i32>} : memref<128x36xf32, #tpu.memory_space<vmem>>, vector<128x4xf32>,
    %c0_28 = arith.constant 0 : index
    %c0_29 = arith.constant 0 : index
    %c1_30 = arith.constant 1 : index
    %c0_31 = arith.constant 0 : index
    %11 = vector.load %arg8[%c0_28, %c0_29, %c1_30, %c0_31] : memref<2x10x10x4xf32, #tpu.memory_space<vmem>>, vector<2x8x8x4xf32>
    %12 = vector.shape_cast %11 : vector<2x8x8x4xf32> to vector<128x4xf32>
    %c0_32 = arith.constant 0 : index
    %c4 = arith.constant 4 : index
    %13 = vector.load %arg9[%c0_32, %c4] : memref<128x36xf32, #tpu.memory_space<vmem>>, vector<128x4xf32>
    tpu.vector_store %arg9[%c0_32, %c4], %12 {strides = array<i32>} : memref<128x36xf32, #tpu.memory_space<vmem>>, vector<128x4xf32>,
    %c0_33 = arith.constant 0 : index
    %c0_34 = arith.constant 0 : index
    %c2 = arith.constant 2 : index
    %c0_35 = arith.constant 0 : index
    %14 = vector.load %arg8[%c0_33, %c0_34, %c2, %c0_35] : memref<2x10x10x4xf32, #tpu.memory_space<vmem>>, vector<2x8x8x4xf32>
    %15 = vector.shape_cast %14 : vector<2x8x8x4xf32> to vector<128x4xf32>
    %c0_36 = arith.constant 0 : index
    %c8 = arith.constant 8 : index
    %16 = vector.load %arg9[%c0_36, %c8] : memref<128x36xf32, #tpu.memory_space<vmem>>, vector<128x4xf32>
    tpu.vector_store %arg9[%c0_36, %c8], %15 {strides = array<i32>} : memref<128x36xf32, #tpu.memory_space<vmem>>, vector<128x4xf32>,
    %c0_37 = arith.constant 0 : index
    %c1_38 = arith.constant 1 : index
    %c0_39 = arith.constant 0 : index
    %c0_40 = arith.constant 0 : index
    %17 = vector.load %arg8[%c0_37, %c1_38, %c0_39, %c0_40] : memref<2x10x10x4xf32, #tpu.memory_space<vmem>>, vector<2x8x8x4xf32>
    %18 = vector.shape_cast %17 : vector<2x8x8x4xf32> to vector<128x4xf32>
    %c0_41 = arith.constant 0 : index
    %c12 = arith.constant 12 : index
    %19 = vector.load %arg9[%c0_41, %c12] : memref<128x36xf32, #tpu.memory_space<vmem>>, vector<128x4xf32>
    tpu.vector_store %arg9[%c0_41, %c12], %18 {strides = array<i32>} : memref<128x36xf32, #tpu.memory_space<vmem>>, vector<128x4xf32>,
    %c0_42 = arith.constant 0 : index
    %c1_43 = arith.constant 1 : index
    %c1_44 = arith.constant 1 : index
    %c0_45 = arith.constant 0 : index
    %20 = vector.load %arg8[%c0_42, %c1_43, %c1_44, %c0_45] : memref<2x10x10x4xf32, #tpu.memory_space<vmem>>, vector<2x8x8x4xf32>
    %21 = vector.shape_cast %20 : vector<2x8x8x4xf32> to vector<128x4xf32>
    %c0_46 = arith.constant 0 : index
    %c16 = arith.constant 16 : index
    %22 = vector.load %arg9[%c0_46, %c16] : memref<128x36xf32, #tpu.memory_space<vmem>>, vector<128x4xf32>
    tpu.vector_store %arg9[%c0_46, %c16], %21 {strides = array<i32>} : memref<128x36xf32, #tpu.memory_space<vmem>>, vector<128x4xf32>,
    %c0_47 = arith.constant 0 : index
    %c1_48 = arith.constant 1 : index
    %c2_49 = arith.constant 2 : index
    %c0_50 = arith.constant 0 : index
    %23 = vector.load %arg8[%c0_47, %c1_48, %c2_49, %c0_50] : memref<2x10x10x4xf32, #tpu.memory_space<vmem>>, vector<2x8x8x4xf32>
    %24 = vector.shape_cast %23 : vector<2x8x8x4xf32> to vector<128x4xf32>
    %c0_51 = arith.constant 0 : index
    %c20 = arith.constant 20 : index
    %25 = vector.load %arg9[%c0_51, %c20] : memref<128x36xf32, #tpu.memory_space<vmem>>, vector<128x4xf32>
    tpu.vector_store %arg9[%c0_51, %c20], %24 {strides = array<i32>} : memref<128x36xf32, #tpu.memory_space<vmem>>, vector<128x4xf32>,
    %c0_52 = arith.constant 0 : index
    %c2_53 = arith.constant 2 : index
    %c0_54 = arith.constant 0 : index
    %c0_55 = arith.constant 0 : index
    %26 = vector.load %arg8[%c0_52, %c2_53, %c0_54, %c0_55] : memref<2x10x10x4xf32, #tpu.memory_space<vmem>>, vector<2x8x8x4xf32>
    %27 = vector.shape_cast %26 : vector<2x8x8x4xf32> to vector<128x4xf32>
    %c0_56 = arith.constant 0 : index
    %c24 = arith.constant 24 : index
    %28 = vector.load %arg9[%c0_56, %c24] : memref<128x36xf32, #tpu.memory_space<vmem>>, vector<128x4xf32>
    tpu.vector_store %arg9[%c0_56, %c24], %27 {strides = array<i32>} : memref<128x36xf32, #tpu.memory_space<vmem>>, vector<128x4xf32>,
    %c0_57 = arith.constant 0 : index
    %c2_58 = arith.constant 2 : index
    %c1_59 = arith.constant 1 : index
    %c0_60 = arith.constant 0 : index
    %29 = vector.load %arg8[%c0_57, %c2_58, %c1_59, %c0_60] : memref<2x10x10x4xf32, #tpu.memory_space<vmem>>, vector<2x8x8x4xf32>
    %30 = vector.shape_cast %29 : vector<2x8x8x4xf32> to vector<128x4xf32>
    %c0_61 = arith.constant 0 : index
    %c28 = arith.constant 28 : index
    %31 = vector.load %arg9[%c0_61, %c28] : memref<128x36xf32, #tpu.memory_space<vmem>>, vector<128x4xf32>
    tpu.vector_store %arg9[%c0_61, %c28], %30 {strides = array<i32>} : memref<128x36xf32, #tpu.memory_space<vmem>>, vector<128x4xf32>,
    %c0_62 = arith.constant 0 : index
    %c2_63 = arith.constant 2 : index
    %c2_64 = arith.constant 2 : index
    %c0_65 = arith.constant 0 : index
    %32 = vector.load %arg8[%c0_62, %c2_63, %c2_64, %c0_65] : memref<2x10x10x4xf32, #tpu.memory_space<vmem>>, vector<2x8x8x4xf32>
    %33 = vector.shape_cast %32 : vector<2x8x8x4xf32> to vector<128x4xf32>
    %c0_66 = arith.constant 0 : index
    %c32 = arith.constant 32 : index
    %34 = vector.load %arg9[%c0_66, %c32] : memref<128x36xf32, #tpu.memory_space<vmem>>, vector<128x4xf32>
    tpu.vector_store %arg9[%c0_66, %c32], %33 {strides = array<i32>} : memref<128x36xf32, #tpu.memory_space<vmem>>, vector<128x4xf32>,
    %c0_67 = arith.constant 0 : index
    %c0_68 = arith.constant 0 : index
    %35 = vector.load %arg9[%c0_67, %c0_68] : memref<128x36xf32, #tpu.memory_space<vmem>>, vector<128x36xf32>
    %c0_69 = arith.constant 0 : index
    %c0_70 = arith.constant 0 : index
    %36 = vector.load %arg1[%c0_69, %c0_70] : memref<36x16xf32, #tpu.memory_space<vmem>>, vector<36x16xf32>
    %cst_71 = arith.constant dense<0.000000e+00> : vector<128x16xf32>
    %37 = tpu.matmul %35, %36, %cst_71 {dimension_numbers = #tpu.dot_dimension_numbers<[1], [0], [0], [1], [0, 0, 1, 1], [], []>} : vector<128x36xf32>, vector<36x16xf32>, vector<128x16xf32> -> vector<128x16xf32>
    %cst_72 = arith.constant dense<0.000000e+00> : vector<16xf32>
    %38 = vector.multi_reduction <add>, %37, %cst_72 [0] : vector<128x16xf32> to vector<16xf32>
    %39 = vector.shape_cast %38 : vector<16xf32> to vector<1x16xf32>
    %cst_73 = arith.constant 1.280000e+02 : f32
    %40 = vector.broadcast %cst_73 : f32 to vector<1x16xf32>
    %41 = arith.divf %39, %40 : vector<1x16xf32>
    %42 = vector.broadcast %41 : vector<1x16xf32> to vector<128x16xf32>
    %43 = arith.subf %37, %42 : vector<128x16xf32>
    %44 = arith.mulf %43, %43 : vector<128x16xf32>
    %cst_74 = arith.constant dense<0.000000e+00> : vector<16xf32>
    %45 = vector.multi_reduction <add>, %44, %cst_74 [0] : vector<128x16xf32> to vector<16xf32>
    %46 = vector.shape_cast %45 : vector<16xf32> to vector<1x16xf32>
    %cst_75 = arith.constant 1.280000e+02 : f32
    %47 = vector.broadcast %cst_75 : f32 to vector<1x16xf32>
    %48 = arith.divf %46, %47 : vector<1x16xf32>
    %c0_76 = arith.constant 0 : index
    %c0_77 = arith.constant 0 : index
    %49 = vector.load %arg2[%c0_76, %c0_77] : memref<1x16xf32, #tpu.memory_space<vmem>>, vector<1x16xf32>
    %cst_78 = arith.constant 9.99999974E-6 : f32
    %50 = vector.broadcast %cst_78 : f32 to vector<1x16xf32>
    %51 = arith.addf %48, %50 : vector<1x16xf32>
    %52 = math.rsqrt %51 : vector<1x16xf32>
    %53 = arith.mulf %49, %52 : vector<1x16xf32>
    %c0_79 = arith.constant 0 : index
    %c0_80 = arith.constant 0 : index
    %54 = vector.load %arg3[%c0_79, %c0_80] : memref<1x16xf32, #tpu.memory_space<vmem>>, vector<1x16xf32>
    %55 = arith.mulf %41, %53 : vector<1x16xf32>
    %56 = arith.subf %54, %55 : vector<1x16xf32>
    %57 = vector.broadcast %53 : vector<1x16xf32> to vector<128x16xf32>
    %58 = arith.mulf %37, %57 : vector<128x16xf32>
    %59 = vector.broadcast %56 : vector<1x16xf32> to vector<128x16xf32>
    %60 = arith.addf %58, %59 : vector<128x16xf32>
    %cst_81 = arith.constant 2.000000e-01 : f32
    %61 = vector.broadcast %cst_81 : f32 to vector<128x16xf32>
    %62 = arith.mulf %61, %60 : vector<128x16xf32>
    %63 = arith.maximumf %60, %62 : vector<128x16xf32>
    %64 = vector.shape_cast %63 : vector<128x16xf32> to vector<2x8x8x16xf32>
    %cst_82 = arith.constant 0.000000e+00 : f32
    %65 = vector.broadcast %cst_82 : f32 to vector<2x1x10x16xf32>
    %cst_83 = arith.constant 0.000000e+00 : f32
    %66 = vector.broadcast %cst_83 : f32 to vector<2x8x1x16xf32>
    %c0_84 = arith.constant 0 : index
    %c0_85 = arith.constant 0 : index
    %c0_86 = arith.constant 0 : index
    %c0_87 = arith.constant 0 : index
    %67 = vector.load %arg10[%c0_84, %c0_85, %c0_86, %c0_87] : memref<2x10x10x16xf32, #tpu.memory_space<vmem>>, vector<2x1x10x16xf32>
    tpu.vector_store %arg10[%c0_84, %c0_85, %c0_86, %c0_87], %65 {strides = array<i32>} : memref<2x10x10x16xf32, #tpu.memory_space<vmem>>, vector<2x1x10x16xf32>,
    %c0_88 = arith.constant 0 : index
    %c9_89 = arith.constant 9 : index
    %c0_90 = arith.constant 0 : index
    %c0_91 = arith.constant 0 : index
    %68 = vector.load %arg10[%c0_88, %c9_89, %c0_90, %c0_91] : memref<2x10x10x16xf32, #tpu.memory_space<vmem>>, vector<2x1x10x16xf32>
    tpu.vector_store %arg10[%c0_88, %c9_89, %c0_90, %c0_91], %65 {strides = array<i32>} : memref<2x10x10x16xf32, #tpu.memory_space<vmem>>, vector<2x1x10x16xf32>,
    %c0_92 = arith.constant 0 : index
    %c1_93 = arith.constant 1 : index
    %c0_94 = arith.constant 0 : index
    %c0_95 = arith.constant 0 : index
    %69 = vector.load %arg10[%c0_92, %c1_93, %c0_94, %c0_95] : memref<2x10x10x16xf32, #tpu.memory_space<vmem>>, vector<2x8x1x16xf32>
    tpu.vector_store %arg10[%c0_92, %c1_93, %c0_94, %c0_95], %66 {strides = array<i32>} : memref<2x10x10x16xf32, #tpu.memory_space<vmem>>, vector<2x8x1x16xf32>,
    %c0_96 = arith.constant 0 : index
    %c1_97 = arith.constant 1 : index
    %c9_98 = arith.constant 9 : index
    %c0_99 = arith.constant 0 : index
    %70 = vector.load %arg10[%c0_96, %c1_97, %c9_98, %c0_99] : memref<2x10x10x16xf32, #tpu.memory_space<vmem>>, vector<2x8x1x16xf32>
    tpu.vector_store %arg10[%c0_96, %c1_97, %c9_98, %c0_99], %66 {strides = array<i32>} : memref<2x10x10x16xf32, #tpu.memory_space<vmem>>, vector<2x8x1x16xf32>,
    %c0_100 = arith.constant 0 : index
    %c1_101 = arith.constant 1 : index
    %c1_102 = arith.constant 1 : index
    %c0_103 = arith.constant 0 : index
    %71 = vector.load %arg10[%c0_100, %c1_101, %c1_102, %c0_103] : memref<2x10x10x16xf32, #tpu.memory_space<vmem>>, vector<2x8x8x16xf32>
    tpu.vector_store %arg10[%c0_100, %c1_101, %c1_102, %c0_103], %64 {strides = array<i32>} : memref<2x10x10x16xf32, #tpu.memory_space<vmem>>, vector<2x8x8x16xf32>,
    %c0_104 = arith.constant 0 : index
    %c0_105 = arith.constant 0 : index
    %c0_106 = arith.constant 0 : index
    %c0_107 = arith.constant 0 : index
    %72 = vector.load %arg10[%c0_104, %c0_105, %c0_106, %c0_107] : memref<2x10x10x16xf32, #tpu.memory_space<vmem>>, vector<2x8x8x16xf32>
    %73 = vector.shape_cast %72 : vector<2x8x8x16xf32> to vector<128x16xf32>
    %c0_108 = arith.constant 0 : index
    %c0_109 = arith.constant 0 : index
    %74 = vector.load %arg11[%c0_108, %c0_109] : memref<128x144xf32, #tpu.memory_space<vmem>>, vector<128x16xf32>
    tpu.vector_store %arg11[%c0_108, %c0_109], %73 {strides = array<i32>} : memref<128x144xf32, #tpu.memory_space<vmem>>, vector<128x16xf32>,
    %c0_110 = arith.constant 0 : index
    %c0_111 = arith.constant 0 : index
    %c1_112 = arith.constant 1 : index
    %c0_113 = arith.constant 0 : index
    %75 = vector.load %arg10[%c0_110, %c0_111, %c1_112, %c0_113] : memref<2x10x10x16xf32, #tpu.memory_space<vmem>>, vector<2x8x8x16xf32>
    %76 = vector.shape_cast %75 : vector<2x8x8x16xf32> to vector<128x16xf32>
    %c0_114 = arith.constant 0 : index
    %c16_115 = arith.constant 16 : index
    %77 = vector.load %arg11[%c0_114, %c16_115] : memref<128x144xf32, #tpu.memory_space<vmem>>, vector<128x16xf32>
    tpu.vector_store %arg11[%c0_114, %c16_115], %76 {strides = array<i32>} : memref<128x144xf32, #tpu.memory_space<vmem>>, vector<128x16xf32>,
    %c0_116 = arith.constant 0 : index
    %c0_117 = arith.constant 0 : index
    %c2_118 = arith.constant 2 : index
    %c0_119 = arith.constant 0 : index
    %78 = vector.load %arg10[%c0_116, %c0_117, %c2_118, %c0_119] : memref<2x10x10x16xf32, #tpu.memory_space<vmem>>, vector<2x8x8x16xf32>
    %79 = vector.shape_cast %78 : vector<2x8x8x16xf32> to vector<128x16xf32>
    %c0_120 = arith.constant 0 : index
    %c32_121 = arith.constant 32 : index
    %80 = vector.load %arg11[%c0_120, %c32_121] : memref<128x144xf32, #tpu.memory_space<vmem>>, vector<128x16xf32>
    tpu.vector_store %arg11[%c0_120, %c32_121], %79 {strides = array<i32>} : memref<128x144xf32, #tpu.memory_space<vmem>>, vector<128x16xf32>,
    %c0_122 = arith.constant 0 : index
    %c1_123 = arith.constant 1 : index
    %c0_124 = arith.constant 0 : index
    %c0_125 = arith.constant 0 : index
    %81 = vector.load %arg10[%c0_122, %c1_123, %c0_124, %c0_125] : memref<2x10x10x16xf32, #tpu.memory_space<vmem>>, vector<2x8x8x16xf32>
    %82 = vector.shape_cast %81 : vector<2x8x8x16xf32> to vector<128x16xf32>
    %c0_126 = arith.constant 0 : index
    %c48 = arith.constant 48 : index
    %83 = vector.load %arg11[%c0_126, %c48] : memref<128x144xf32, #tpu.memory_space<vmem>>, vector<128x16xf32>
    tpu.vector_store %arg11[%c0_126, %c48], %82 {strides = array<i32>} : memref<128x144xf32, #tpu.memory_space<vmem>>, vector<128x16xf32>,
    %c0_127 = arith.constant 0 : index
    %c1_128 = arith.constant 1 : index
    %c1_129 = arith.constant 1 : index
    %c0_130 = arith.constant 0 : index
    %84 = vector.load %arg10[%c0_127, %c1_128, %c1_129, %c0_130] : memref<2x10x10x16xf32, #tpu.memory_space<vmem>>, vector<2x8x8x16xf32>
    %85 = vector.shape_cast %84 : vector<2x8x8x16xf32> to vector<128x16xf32>
    %c0_131 = arith.constant 0 : index
    %c64 = arith.constant 64 : index
    %86 = vector.load %arg11[%c0_131, %c64] : memref<128x144xf32, #tpu.memory_space<vmem>>, vector<128x16xf32>
    tpu.vector_store %arg11[%c0_131, %c64], %85 {strides = array<i32>} : memref<128x144xf32, #tpu.memory_space<vmem>>, vector<128x16xf32>,
    %c0_132 = arith.constant 0 : index
    %c1_133 = arith.constant 1 : index
    %c2_134 = arith.constant 2 : index
    %c0_135 = arith.constant 0 : index
    %87 = vector.load %arg10[%c0_132, %c1_133, %c2_134, %c0_135] : memref<2x10x10x16xf32, #tpu.memory_space<vmem>>, vector<2x8x8x16xf32>
    %88 = vector.shape_cast %87 : vector<2x8x8x16xf32> to vector<128x16xf32>
    %c0_136 = arith.constant 0 : index
    %c80 = arith.constant 80 : index
    %89 = vector.load %arg11[%c0_136, %c80] : memref<128x144xf32, #tpu.memory_space<vmem>>, vector<128x16xf32>
    tpu.vector_store %arg11[%c0_136, %c80], %88 {strides = array<i32>} : memref<128x144xf32, #tpu.memory_space<vmem>>, vector<128x16xf32>,
    %c0_137 = arith.constant 0 : index
    %c2_138 = arith.constant 2 : index
    %c0_139 = arith.constant 0 : index
    %c0_140 = arith.constant 0 : index
    %90 = vector.load %arg10[%c0_137, %c2_138, %c0_139, %c0_140] : memref<2x10x10x16xf32, #tpu.memory_space<vmem>>, vector<2x8x8x16xf32>
    %91 = vector.shape_cast %90 : vector<2x8x8x16xf32> to vector<128x16xf32>
    %c0_141 = arith.constant 0 : index
    %c96 = arith.constant 96 : index
    %92 = vector.load %arg11[%c0_141, %c96] : memref<128x144xf32, #tpu.memory_space<vmem>>, vector<128x16xf32>
    tpu.vector_store %arg11[%c0_141, %c96], %91 {strides = array<i32>} : memref<128x144xf32, #tpu.memory_space<vmem>>, vector<128x16xf32>,
    %c0_142 = arith.constant 0 : index
    %c2_143 = arith.constant 2 : index
    %c1_144 = arith.constant 1 : index
    %c0_145 = arith.constant 0 : index
    %93 = vector.load %arg10[%c0_142, %c2_143, %c1_144, %c0_145] : memref<2x10x10x16xf32, #tpu.memory_space<vmem>>, vector<2x8x8x16xf32>
    %94 = vector.shape_cast %93 : vector<2x8x8x16xf32> to vector<128x16xf32>
    %c0_146 = arith.constant 0 : index
    %c112 = arith.constant 112 : index
    %95 = vector.load %arg11[%c0_146, %c112] : memref<128x144xf32, #tpu.memory_space<vmem>>, vector<128x16xf32>
    tpu.vector_store %arg11[%c0_146, %c112], %94 {strides = array<i32>} : memref<128x144xf32, #tpu.memory_space<vmem>>, vector<128x16xf32>,
    %c0_147 = arith.constant 0 : index
    %c2_148 = arith.constant 2 : index
    %c2_149 = arith.constant 2 : index
    %c0_150 = arith.constant 0 : index
    %96 = vector.load %arg10[%c0_147, %c2_148, %c2_149, %c0_150] : memref<2x10x10x16xf32, #tpu.memory_space<vmem>>, vector<2x8x8x16xf32>
    %97 = vector.shape_cast %96 : vector<2x8x8x16xf32> to vector<128x16xf32>
    %c0_151 = arith.constant 0 : index
    %c128 = arith.constant 128 : index
    %98 = vector.load %arg11[%c0_151, %c128] : memref<128x144xf32, #tpu.memory_space<vmem>>, vector<128x16xf32>
    tpu.vector_store %arg11[%c0_151, %c128], %97 {strides = array<i32>} : memref<128x144xf32, #tpu.memory_space<vmem>>, vector<128x16xf32>,
    %c0_152 = arith.constant 0 : index
    %c0_153 = arith.constant 0 : index
    %99 = vector.load %arg11[%c0_152, %c0_153] : memref<128x144xf32, #tpu.memory_space<vmem>>, vector<128x144xf32>
    %c0_154 = arith.constant 0 : index
    %c0_155 = arith.constant 0 : index
    %100 = vector.load %arg4[%c0_154, %c0_155] : memref<144x16xf32, #tpu.memory_space<vmem>>, vector<144x16xf32>
    %cst_156 = arith.constant dense<0.000000e+00> : vector<128x16xf32>
    %101 = tpu.matmul %99, %100, %cst_156 {dimension_numbers = #tpu.dot_dimension_numbers<[1], [0], [0], [1], [0, 0, 1, 1], [], []>} : vector<128x144xf32>, vector<144x16xf32>, vector<128x16xf32> -> vector<128x16xf32>
    %cst_157 = arith.constant dense<0.000000e+00> : vector<16xf32>
    %102 = vector.multi_reduction <add>, %101, %cst_157 [0] : vector<128x16xf32> to vector<16xf32>
    %103 = vector.shape_cast %102 : vector<16xf32> to vector<1x16xf32>
    %cst_158 = arith.constant 1.280000e+02 : f32
    %104 = vector.broadcast %cst_158 : f32 to vector<1x16xf32>
    %105 = arith.divf %103, %104 : vector<1x16xf32>
    %106 = vector.broadcast %105 : vector<1x16xf32> to vector<128x16xf32>
    %107 = arith.subf %101, %106 : vector<128x16xf32>
    %108 = arith.mulf %107, %107 : vector<128x16xf32>
    %cst_159 = arith.constant dense<0.000000e+00> : vector<16xf32>
    %109 = vector.multi_reduction <add>, %108, %cst_159 [0] : vector<128x16xf32> to vector<16xf32>
    %110 = vector.shape_cast %109 : vector<16xf32> to vector<1x16xf32>
    %cst_160 = arith.constant 1.280000e+02 : f32
    %111 = vector.broadcast %cst_160 : f32 to vector<1x16xf32>
    %112 = arith.divf %110, %111 : vector<1x16xf32>
    %c0_161 = arith.constant 0 : index
    %c0_162 = arith.constant 0 : index
    %113 = vector.load %arg5[%c0_161, %c0_162] : memref<1x16xf32, #tpu.memory_space<vmem>>, vector<1x16xf32>
    %cst_163 = arith.constant 9.99999974E-6 : f32
    %114 = vector.broadcast %cst_163 : f32 to vector<1x16xf32>
    %115 = arith.addf %112, %114 : vector<1x16xf32>
    %116 = math.rsqrt %115 : vector<1x16xf32>
    %117 = arith.mulf %113, %116 : vector<1x16xf32>
    %c0_164 = arith.constant 0 : index
    %c0_165 = arith.constant 0 : index
    %118 = vector.load %arg6[%c0_164, %c0_165] : memref<1x16xf32, #tpu.memory_space<vmem>>, vector<1x16xf32>
    %119 = arith.mulf %105, %117 : vector<1x16xf32>
    %120 = arith.subf %118, %119 : vector<1x16xf32>
    %121 = vector.broadcast %117 : vector<1x16xf32> to vector<128x16xf32>
    %122 = arith.mulf %101, %121 : vector<128x16xf32>
    %123 = vector.broadcast %120 : vector<1x16xf32> to vector<128x16xf32>
    %124 = arith.addf %122, %123 : vector<128x16xf32>
    %cst_166 = arith.constant 2.000000e-01 : f32
    %125 = vector.broadcast %cst_166 : f32 to vector<128x16xf32>
    %126 = arith.mulf %125, %124 : vector<128x16xf32>
    %127 = arith.maximumf %124, %126 : vector<128x16xf32>
    %c0_167 = arith.constant 0 : index
    %c0_168 = arith.constant 0 : index
    %128 = vector.load %arg7[%c0_167, %c0_168] : memref<128x16xf32, #tpu.memory_space<vmem>>, vector<128x16xf32>
    tpu.vector_store %arg7[%c0_167, %c0_168], %127 {strides = array<i32>} : memref<128x16xf32, #tpu.memory_space<vmem>>, vector<128x16xf32>,
    return
  }
}

</mosaic_0001>

<llo_original>
// kernel: sepdown_forward.1
$region0: #{sepdown_forward.1}
  #allocation0 [shape = 'u32[]', space=smem, size = 0x4, offset = 0x4, fixed_abs, tag = 'smem constant byte address 0x4 - core index']
  #allocation1 [shape = 'u32[144,128]{1,0:T(1,128)}', space=vmem, size = 0x12000, scoped, tag = 'internal scratch']
  #allocation2 [shape = 'f32[2,10,10,4]{3,2,1,0:T(8,128)}', space=vmem, size = 0x28000, scoped, tag = 'scratch operand']
  #allocation3 [shape = 'f32[128,36]{1,0:T(8,128)}', space=vmem, size = 0x10000, scoped, tag = 'scratch operand']
  #allocation4 [shape = 'f32[2,10,10,16]{3,2,1,0:T(8,128)}', space=vmem, size = 0x28000, scoped, tag = 'scratch operand']
  #allocation5 [shape = 'f32[128,144]{1,0:T(8,128)}', space=vmem, size = 0x20000, scoped, tag = 'scratch operand']
  %s0 = inlined_call_operand.vmem [shape: f32[2,8,8,4], index: 0, kind: input, shape index: {}]
  %s1 = inlined_call_operand.vmem [shape: f32[36,16], index: 1, kind: input, shape index: {}]
  %s2 = inlined_call_operand.vmem [shape: f32[1,16], index: 2, kind: input, shape index: {}]
  %s3 = inlined_call_operand.vmem [shape: f32[1,16], index: 3, kind: input, shape index: {}]
  %s4 = inlined_call_operand.vmem [shape: f32[144,16], index: 4, kind: input, shape index: {}]
  %s5 = inlined_call_operand.vmem [shape: f32[1,16], index: 5, kind: input, shape index: {}]
  %s6 = inlined_call_operand.vmem [shape: f32[1,16], index: 6, kind: input, shape index: {}]
  %s7 = inlined_call_operand.hbm [shape: f32[128,16], index: 7, kind: output, shape index: {}]
  %s8 = sld [smem:[#allocation0]]
  $region38: #{sepdown_forward.1} parent=0
    _
  %s10 = ssub.s32 1, %s8
  %s11 = scalar_select 0, %s10, %s8
  $region1: #{sepdown_forward.1} parent=0
    #allocation6 [shape = 'u8[65536]{0}', space=vmem, size = 0x10000, scoped, tag = 'output window, operand 0, single buffered']
    #allocation7 [shape = 's32[1]{0}', space=sflag, size = 0x4, scoped, tag = 'scoped memory for sepdown_forward.1']
    %12 = vsyncpa [#allocation7], 0
    // Predicated region
    $region2: #{sepdown_forward.1} parent=1 // pred_check
      _
    $region3: #{sepdown_forward.1} parent=1 // pred_check_branch
      %14 = sbr.rel (0) target = $region5
    $region4: #{sepdown_forward.1} parent=1 // pred_region
      _
    $region5: #{sepdown_forward.1} parent=1 // pred_fallthru
      _
    // Predicated region
    $region6: #{sepdown_forward.1} parent=1 // pred_check
      _
    $region7: #{sepdown_forward.1} parent=1 // pred_check_branch
      %16 = sbr.rel (0) target = $region9
    $region8: #{sepdown_forward.1} parent=1 // pred_region
      _
    $region9: #{sepdown_forward.1} parent=1 // pred_fallthru
      _
    // Predicated region
    $region10: #{sepdown_forward.1} parent=1 // pred_check
      _
    $region11: #{sepdown_forward.1} parent=1 // pred_check_branch
      %18 = sbr.rel (0) target = $region13
    $region12: #{sepdown_forward.1} parent=1 // pred_region
      _
    $region13: #{sepdown_forward.1} parent=1 // pred_fallthru
      _
    // Predicated region
    $region14: #{sepdown_forward.1} parent=1 // pred_check
      _
    $region15: #{sepdown_forward.1} parent=1 // pred_check_branch
      %20 = sbr.rel (0) target = $region17
    $region16: #{sepdown_forward.1} parent=1 // pred_region
      _
    $region17: #{sepdown_forward.1} parent=1 // pred_fallthru
      _
    // Predicated region
    $region18: #{sepdown_forward.1} parent=1 // pred_check
      _
    $region19: #{sepdown_forward.1} parent=1 // pred_check_branch
      %22 = sbr.rel (0) target = $region21
    $region20: #{sepdown_forward.1} parent=1 // pred_region
      _
    $region21: #{sepdown_forward.1} parent=1 // pred_fallthru
      _
    // Predicated region
    $region22: #{sepdown_forward.1} parent=1 // pred_check
      _
    $region23: #{sepdown_forward.1} parent=1 // pred_check_branch
      %24 = sbr.rel (0) target = $region25
    $region24: #{sepdown_forward.1} parent=1 // pred_region
      _
    $region25: #{sepdown_forward.1} parent=1 // pred_fallthru
      _
    // Predicated region
    $region26: #{sepdown_forward.1} parent=1 // pred_check
      _
    $region27: #{sepdown_forward.1} parent=1 // pred_check_branch
      %26 = sbr.rel (0) target = $region29
    $region28: #{sepdown_forward.1} parent=1 // pred_region
      _
    $region29: #{sepdown_forward.1} parent=1 // pred_fallthru
      _
    %v27 = vld [vmem:[%s0] sm:$0xff]
    %v28 = vld [vmem:[%s0 + $0x8] sm:$0xff]
    %v29 = vld [vmem:[%s0 + $0x10] sm:$0xff]
    %v30 = vld [vmem:[%s0 + $0x18] sm:$0xff]
    %v31 = vld [vmem:[%s0 + $0x20] sm:$0xff]
    %v32 = vld [vmem:[%s0 + $0x28] sm:$0xff]
    %v33 = vld [vmem:[%s0 + $0x30] sm:$0xff]
    %v34 = vld [vmem:[%s0 + $0x38] sm:$0xff]
    %v35 = vld [vmem:[%s0 + $0x40] sm:$0xff]
    %v36 = vld [vmem:[%s0 + $0x48] sm:$0xff]
    %v37 = vld [vmem:[%s0 + $0x50] sm:$0xff]
    %v38 = vld [vmem:[%s0 + $0x58] sm:$0xff]
    %v39 = vld [vmem:[%s0 + $0x60] sm:$0xff]
    %v40 = vld [vmem:[%s0 + $0x68] sm:$0xff]
    %v41 = vld [vmem:[%s0 + $0x70] sm:$0xff]
    %v42 = vld [vmem:[%s0 + $0x78] sm:$0xff]
    %vm43 = vcmask 31744
    %44 = vst.msk [vmem:[#allocation2] sm:$0xff] %vm43, 0.0
    %vm45 = vcmask 25600
    %46 = vst.msk [vmem:[#allocation2 + $0x8] sm:$0x3] %vm45, 0.0
    %47 = vst.msk [vmem:[#allocation2 + $0xa0] sm:$0xff] %vm43, 0.0
    %48 = vst.msk [vmem:[#allocation2 + $0xa8] sm:$0x3] %vm45, 0.0
    %s49 = scalar_lea.vmem [#allocation2], 144
    %50 = vst.msk [vmem:[%s49] sm:$0xff] %vm43, 0.0
    %51 = vst.msk [vmem:[%s49 + $0x8] sm:$0x3] %vm45, 0.0
    %52 = vst.msk [vmem:[%s49 + $0xa0] sm:$0xff] %vm43, 0.0
    %53 = vst.msk [vmem:[%s49 + $0xa8] sm:$0x3] %vm45, 0.0
    %s54 = scalar_lea.vmem [#allocation2], 16
    %vm55 = vcmask 24576
    %56 = vst.msk [vmem:[%s54] sm:$0x1] %vm55, 0.0
    %57 = vst.msk [vmem:[%s54 + $0x10] sm:$0x1] %vm55, 0.0
    %58 = vst.msk [vmem:[%s54 + $0x20] sm:$0x1] %vm55, 0.0
    %59 = vst.msk [vmem:[%s54 + $0x30] sm:$0x1] %vm55, 0.0
    %60 = vst.msk [vmem:[%s54 + $0x40] sm:$0x1] %vm55, 0.0
    %61 = vst.msk [vmem:[%s54 + $0x50] sm:$0x1] %vm55, 0.0
    %62 = vst.msk [vmem:[%s54 + $0x60] sm:$0x1] %vm55, 0.0
    %63 = vst.msk [vmem:[%s54 + $0x70] sm:$0x1] %vm55, 0.0
    %64 = vst.msk [vmem:[%s54 + $0xa0] sm:$0x1] %vm55, 0.0
    %65 = vst.msk [vmem:[%s54 + $0xb0] sm:$0x1] %vm55, 0.0
    %66 = vst.msk [vmem:[%s54 + $0xc0] sm:$0x1] %vm55, 0.0
    %67 = vst.msk [vmem:[%s54 + $0xd0] sm:$0x1] %vm55, 0.0
    %68 = vst.msk [vmem:[%s54 + $0xe0] sm:$0x1] %vm55, 0.0
    %69 = vst.msk [vmem:[%s54 + $0xf0] sm:$0x1] %vm55, 0.0
    %70 = vst.msk [vmem:[%s54 + $0x100] sm:$0x1] %vm55, 0.0
    %71 = vst.msk [vmem:[%s54 + $0x110] sm:$0x1] %vm55, 0.0
    %72 = vst.msk [vmem:[%s54 + $0x9] sm:$0x1] %vm55, 0.0
    %73 = vst.msk [vmem:[%s54 + $0x19] sm:$0x1] %vm55, 0.0
    %74 = vst.msk [vmem:[%s54 + $0x29] sm:$0x1] %vm55, 0.0
    %75 = vst.msk [vmem:[%s54 + $0x39] sm:$0x1] %vm55, 0.0
    %76 = vst.msk [vmem:[%s54 + $0x49] sm:$0x1] %vm55, 0.0
    %77 = vst.msk [vmem:[%s54 + $0x59] sm:$0x1] %vm55, 0.0
    %78 = vst.msk [vmem:[%s54 + $0x69] sm:$0x1] %vm55, 0.0
    %79 = vst.msk [vmem:[%s54 + $0x79] sm:$0x1] %vm55, 0.0
    %80 = vst.msk [vmem:[%s54 + $0xa9] sm:$0x1] %vm55, 0.0
    %81 = vst.msk [vmem:[%s54 + $0xb9] sm:$0x1] %vm55, 0.0
    %82 = vst.msk [vmem:[%s54 + $0xc9] sm:$0x1] %vm55, 0.0
    %83 = vst.msk [vmem:[%s54 + $0xd9] sm:$0x1] %vm55, 0.0
    %84 = vst.msk [vmem:[%s54 + $0xe9] sm:$0x1] %vm55, 0.0
    %85 = vst.msk [vmem:[%s54 + $0xf9] sm:$0x1] %vm55, 0.0
    %86 = vst.msk [vmem:[%s54 + $0x109] sm:$0x1] %vm55, 0.0
    %87 = vst.msk [vmem:[%s54 + $0x119] sm:$0x1] %vm55, 0.0
    %88 = vst.msk [vmem:[%s54 + $0x1] sm:$0xff] %vm43, %v27
    %89 = vst.msk [vmem:[%s54 + $0x11] sm:$0xff] %vm43, %v28
    %90 = vst.msk [vmem:[%s54 + $0x21] sm:$0xff] %vm43, %v29
    %91 = vst.msk [vmem:[%s54 + $0x31] sm:$0xff] %vm43, %v30
    %92 = vst.msk [vmem:[%s54 + $0x41] sm:$0xff] %vm43, %v31
    %93 = vst.msk [vmem:[%s54 + $0x51] sm:$0xff] %vm43, %v32
    %94 = vst.msk [vmem:[%s54 + $0x61] sm:$0xff] %vm43, %v33
    %95 = vst.msk [vmem:[%s54 + $0x71] sm:$0xff] %vm43, %v34
    %96 = vst.msk [vmem:[%s54 + $0xa1] sm:$0xff] %vm43, %v35
    %97 = vst.msk [vmem:[%s54 + $0xb1] sm:$0xff] %vm43, %v36
    %98 = vst.msk [vmem:[%s54 + $0xc1] sm:$0xff] %vm43, %v37
    %99 = vst.msk [vmem:[%s54 + $0xd1] sm:$0xff] %vm43, %v38
    %100 = vst.msk [vmem:[%s54 + $0xe1] sm:$0xff] %vm43, %v39
    %101 = vst.msk [vmem:[%s54 + $0xf1] sm:$0xff] %vm43, %v40
    %102 = vst.msk [vmem:[%s54 + $0x101] sm:$0xff] %vm43, %v41
    %103 = vst.msk [vmem:[%s54 + $0x111] sm:$0xff] %vm43, %v42
    %v104 = vld [vmem:[#allocation2] sm:$0xff]
    %v105 = vld [vmem:[#allocation2 + $0x10] sm:$0xff]
    %v106 = vld [vmem:[#allocation2 + $0x20] sm:$0xff]
    %v107 = vld [vmem:[#allocation2 + $0x30] sm:$0xff]
    %v108 = vld [vmem:[#allocation2 + $0x40] sm:$0xff]
    %v109 = vld [vmem:[#allocation2 + $0x50] sm:$0xff]
    %v110 = vld [vmem:[#allocation2 + $0x60] sm:$0xff]
    %v111 = vld [vmem:[#allocation2 + $0x70] sm:$0xff]
    %v112 = vld [vmem:[#allocation2 + $0xa0] sm:$0xff]
    %v113 = vld [vmem:[#allocation2 + $0xb0] sm:$0xff]
    %v114 = vld [vmem:[#allocation2 + $0xc0] sm:$0xff]
    %v115 = vld [vmem:[#allocation2 + $0xd0] sm:$0xff]
    %v116 = vld [vmem:[#allocation2 + $0xe0] sm:$0xff]
    %v117 = vld [vmem:[#allocation2 + $0xf0] sm:$0xff]
    %v118 = vld [vmem:[#allocation2 + $0x100] sm:$0xff]
    %v119 = vld [vmem:[#allocation2 + $0x110] sm:$0xff]
    %120 = vst.msk [vmem:[#allocation3] sm:$0xff] %vm43, %v104
    %121 = vst.msk [vmem:[#allocation3 + $0x8] sm:$0xff] %vm43, %v105
    %122 = vst.msk [vmem:[#allocation3 + $0x10] sm:$0xff] %vm43, %v106
    %123 = vst.msk [vmem:[#allocation3 + $0x18] sm:$0xff] %vm43, %v107
    %124 = vst.msk [vmem:[#allocation3 + $0x20] sm:$0xff] %vm43, %v108
    %125 = vst.msk [vmem:[#allocation3 + $0x28] sm:$0xff] %vm43, %v109
    %126 = vst.msk [vmem:[#allocation3 + $0x30] sm:$0xff] %vm43, %v110
    %127 = vst.msk [vmem:[#allocation3 + $0x38] sm:$0xff] %vm43, %v111
    %128 = vst.msk [vmem:[#allocation3 + $0x40] sm:$0xff] %vm43, %v112
    %129 = vst.msk [vmem:[#allocation3 + $0x48] sm:$0xff] %vm43, %v113
    %130 = vst.msk [vmem:[#allocation3 + $0x50] sm:$0xff] %vm43, %v114
    %131 = vst.msk [vmem:[#allocation3 + $0x58] sm:$0xff] %vm43, %v115
    %132 = vst.msk [vmem:[#allocation3 + $0x60] sm:$0xff] %vm43, %v116
    %133 = vst.msk [vmem:[#allocation3 + $0x68] sm:$0xff] %vm43, %v117
    %134 = vst.msk [vmem:[#allocation3 + $0x70] sm:$0xff] %vm43, %v118
    %135 = vst.msk [vmem:[#allocation3 + $0x78] sm:$0xff] %vm43, %v119
    %v136 = vld [vmem:[#allocation2 + $0x1] sm:$0xff]
    %v137 = vld [vmem:[#allocation2 + $0x11] sm:$0xff]
    %v138 = vld [vmem:[#allocation2 + $0x21] sm:$0xff]
    %v139 = vld [vmem:[#allocation2 + $0x31] sm:$0xff]
    %v140 = vld [vmem:[#allocation2 + $0x41] sm:$0xff]
    %v141 = vld [vmem:[#allocation2 + $0x51] sm:$0xff]
    %v142 = vld [vmem:[#allocation2 + $0x61] sm:$0xff]
    %v143 = vld [vmem:[#allocation2 + $0x71] sm:$0xff]
    %v144 = vld [vmem:[#allocation2 + $0xa1] sm:$0xff]
    %v145 = vld [vmem:[#allocation2 + $0xb1] sm:$0xff]
    %v146 = vld [vmem:[#allocation2 + $0xc1] sm:$0xff]
    %v147 = vld [vmem:[#allocation2 + $0xd1] sm:$0xff]
    %v148 = vld [vmem:[#allocation2 + $0xe1] sm:$0xff]
    %v149 = vld [vmem:[#allocation2 + $0xf1] sm:$0xff]
    %v150 = vld [vmem:[#allocation2 + $0x101] sm:$0xff]
    %v151 = vld [vmem:[#allocation2 + $0x111] sm:$0xff]
    %168 = vrot.lane.b32.xlu0 %v136, 4
    %v169 = vpop.permute.xlu0 %168
    %170 = vrot.lane.b32.xlu0 %v137, 4
    %v171 = vpop.permute.xlu0 %170
    %172 = vrot.lane.b32.xlu0 %v138, 4
    %v173 = vpop.permute.xlu0 %172
    %174 = vrot.lane.b32.xlu0 %v139, 4
    %v175 = vpop.permute.xlu0 %174
    %176 = vrot.lane.b32.xlu0 %v140, 4
    %v177 = vpop.permute.xlu0 %176
    %178 = vrot.lane.b32.xlu0 %v141, 4
    %v179 = vpop.permute.xlu0 %178
    %180 = vrot.lane.b32.xlu0 %v142, 4
    %v181 = vpop.permute.xlu0 %180
    %182 = vrot.lane.b32.xlu0 %v143, 4
    %v183 = vpop.permute.xlu0 %182
    %184 = vrot.lane.b32.xlu0 %v144, 4
    %v185 = vpop.permute.xlu0 %184
    %186 = vrot.lane.b32.xlu0 %v145, 4
    %v187 = vpop.permute.xlu0 %186
    %188 = vrot.lane.b32.xlu0 %v146, 4
    %v189 = vpop.permute.xlu0 %188
    %190 = vrot.lane.b32.xlu0 %v147, 4
    %v191 = vpop.permute.xlu0 %190
    %192 = vrot.lane.b32.xlu0 %v148, 4
    %v193 = vpop.permute.xlu0 %192
    %194 = vrot.lane.b32.xlu0 %v149, 4
    %v195 = vpop.permute.xlu0 %194
    %196 = vrot.lane.b32.xlu0 %v150, 4
    %v197 = vpop.permute.xlu0 %196
    %198 = vrot.lane.b32.xlu0 %v151, 4
    %v199 = vpop.permute.xlu0 %198
    %vm216 = vcmask 64544
    %217 = vst.msk [vmem:[#allocation3] sm:$0xff] %vm216, %v169
    %218 = vst.msk [vmem:[#allocation3 + $0x8] sm:$0xff] %vm216, %v171
    %219 = vst.msk [vmem:[#allocation3 + $0x10] sm:$0xff] %vm216, %v173
    %220 = vst.msk [vmem:[#allocation3 + $0x18] sm:$0xff] %vm216, %v175
    %221 = vst.msk [vmem:[#allocation3 + $0x20] sm:$0xff] %vm216, %v177
    %222 = vst.msk [vmem:[#allocation3 + $0x28] sm:$0xff] %vm216, %v179
    %223 = vst.msk [vmem:[#allocation3 + $0x30] sm:$0xff] %vm216, %v181
    %224 = vst.msk [vmem:[#allocation3 + $0x38] sm:$0xff] %vm216, %v183
    %225 = vst.msk [vmem:[#allocation3 + $0x40] sm:$0xff] %vm216, %v185
    %226 = vst.msk [vmem:[#allocation3 + $0x48] sm:$0xff] %vm216, %v187
    %227 = vst.msk [vmem:[#allocation3 + $0x50] sm:$0xff] %vm216, %v189
    %228 = vst.msk [vmem:[#allocation3 + $0x58] sm:$0xff] %vm216, %v191
    %229 = vst.msk [vmem:[#allocation3 + $0x60] sm:$0xff] %vm216, %v193
    %230 = vst.msk [vmem:[#allocation3 + $0x68] sm:$0xff] %vm216, %v195
    %231 = vst.msk [vmem:[#allocation3 + $0x70] sm:$0xff] %vm216, %v197
    %232 = vst.msk [vmem:[#allocation3 + $0x78] sm:$0xff] %vm216, %v199
    %v233 = vld [vmem:[#allocation2 + $0x2] sm:$0xff]
    %v234 = vld [vmem:[#allocation2 + $0x12] sm:$0xff]
    %v235 = vld [vmem:[#allocation2 + $0x22] sm:$0xff]
    %v236 = vld [vmem:[#allocation2 + $0x32] sm:$0xff]
    %v237 = vld [vmem:[#allocation2 + $0x42] sm:$0xff]
    %v238 = vld [vmem:[#allocation2 + $0x52] sm:$0xff]
    %v239 = vld [vmem:[#allocation2 + $0x62] sm:$0xff]
    %v240 = vld [vmem:[#allocation2 + $0x72] sm:$0xff]
    %v241 = vld [vmem:[#allocation2 + $0xa2] sm:$0xff]
    %v242 = vld [vmem:[#allocation2 + $0xb2] sm:$0xff]
    %v243 = vld [vmem:[#allocation2 + $0xc2] sm:$0xff]
    %v244 = vld [vmem:[#allocation2 + $0xd2] sm:$0xff]
    %v245 = vld [vmem:[#allocation2 + $0xe2] sm:$0xff]
    %v246 = vld [vmem:[#allocation2 + $0xf2] sm:$0xff]
    %v247 = vld [vmem:[#allocation2 + $0x102] sm:$0xff]
    %v248 = vld [vmem:[#allocation2 + $0x112] sm:$0xff]
    %265 = vrot.lane.b32.xlu0 %v233, 8
    %v266 = vpop.permute.xlu0 %265
    %267 = vrot.lane.b32.xlu0 %v234, 8
    %v268 = vpop.permute.xlu0 %267
    %269 = vrot.lane.b32.xlu0 %v235, 8
    %v270 = vpop.permute.xlu0 %269
    %271 = vrot.lane.b32.xlu0 %v236, 8
    %v272 = vpop.permute.xlu0 %271
    %273 = vrot.lane.b32.xlu0 %v237, 8
    %v274 = vpop.permute.xlu0 %273
    %275 = vrot.lane.b32.xlu0 %v238, 8
    %v276 = vpop.permute.xlu0 %275
    %277 = vrot.lane.b32.xlu0 %v239, 8
    %v278 = vpop.permute.xlu0 %277
    %279 = vrot.lane.b32.xlu0 %v240, 8
    %v280 = vpop.permute.xlu0 %279
    %281 = vrot.lane.b32.xlu0 %v241, 8
    %v282 = vpop.permute.xlu0 %281
    %283 = vrot.lane.b32.xlu0 %v242, 8
    %v284 = vpop.permute.xlu0 %283
    %285 = vrot.lane.b32.xlu0 %v243, 8
    %v286 = vpop.permute.xlu0 %285
    %287 = vrot.lane.b32.xlu0 %v244, 8
    %v288 = vpop.permute.xlu0 %287
    %289 = vrot.lane.b32.xlu0 %v245, 8
    %v290 = vpop.permute.xlu0 %289
    %291 = vrot.lane.b32.xlu0 %v246, 8
    %v292 = vpop.permute.xlu0 %291
    %293 = vrot.lane.b32.xlu0 %v247, 8
    %v294 = vpop.permute.xlu0 %293
    %295 = vrot.lane.b32.xlu0 %v248, 8
    %v296 = vpop.permute.xlu0 %295
    %vm313 = vcmask 97344
    %314 = vst.msk [vmem:[#allocation3] sm:$0xff] %vm313, %v266
    %315 = vst.msk [vmem:[#allocation3 + $0x8] sm:$0xff] %vm313, %v268
    %316 = vst.msk [vmem:[#allocation3 + $0x10] sm:$0xff] %vm313, %v270
    %317 = vst.msk [vmem:[#allocation3 + $0x18] sm:$0xff] %vm313, %v272
    %318 = vst.msk [vmem:[#allocation3 + $0x20] sm:$0xff] %vm313, %v274
    %319 = vst.msk [vmem:[#allocation3 + $0x28] sm:$0xff] %vm313, %v276
    %320 = vst.msk [vmem:[#allocation3 + $0x30] sm:$0xff] %vm313, %v278
    %321 = vst.msk [vmem:[#allocation3 + $0x38] sm:$0xff] %vm313, %v280
    %322 = vst.msk [vmem:[#allocation3 + $0x40] sm:$0xff] %vm313, %v282
    %323 = vst.msk [vmem:[#allocation3 + $0x48] sm:$0xff] %vm313, %v284
    %324 = vst.msk [vmem:[#allocation3 + $0x50] sm:$0xff] %vm313, %v286
    %325 = vst.msk [vmem:[#allocation3 + $0x58] sm:$0xff] %vm313, %v288
    %326 = vst.msk [vmem:[#allocation3 + $0x60] sm:$0xff] %vm313, %v290
    %327 = vst.msk [vmem:[#allocation3 + $0x68] sm:$0xff] %vm313, %v292
    %328 = vst.msk [vmem:[#allocation3 + $0x70] sm:$0xff] %vm313, %v294
    %329 = vst.msk [vmem:[#allocation3 + $0x78] sm:$0xff] %vm313, %v296
    %v330 = vld [vmem:[%s54] sm:$0xff]
    %v331 = vld [vmem:[%s54 + $0x10] sm:$0xff]
    %v332 = vld [vmem:[%s54 + $0x20] sm:$0xff]
    %v333 = vld [vmem:[%s54 + $0x30] sm:$0xff]
    %v334 = vld [vmem:[%s54 + $0x40] sm:$0xff]
    %v335 = vld [vmem:[%s54 + $0x50] sm:$0xff]
    %v336 = vld [vmem:[%s54 + $0x60] sm:$0xff]
    %v337 = vld [vmem:[%s54 + $0x70] sm:$0xff]
    %v338 = vld [vmem:[%s54 + $0xa0] sm:$0xff]
    %v339 = vld [vmem:[%s54 + $0xb0] sm:$0xff]
    %v340 = vld [vmem:[%s54 + $0xc0] sm:$0xff]
    %v341 = vld [vmem:[%s54 + $0xd0] sm:$0xff]
    %v342 = vld [vmem:[%s54 + $0xe0] sm:$0xff]
    %v343 = vld [vmem:[%s54 + $0xf0] sm:$0xff]
    %v344 = vld [vmem:[%s54 + $0x100] sm:$0xff]
    %v345 = vld [vmem:[%s54 + $0x110] sm:$0xff]
    %362 = vrot.lane.b32.xlu0 %v330, 12
    %v363 = vpop.permute.xlu0 %362
    %364 = vrot.lane.b32.xlu0 %v331, 12
    %v365 = vpop.permute.xlu0 %364
    %366 = vrot.lane.b32.xlu0 %v332, 12
    %v367 = vpop.permute.xlu0 %366
    %368 = vrot.lane.b32.xlu0 %v333, 12
    %v369 = vpop.permute.xlu0 %368
    %370 = vrot.lane.b32.xlu0 %v334, 12
    %v371 = vpop.permute.xlu0 %370
    %372 = vrot.lane.b32.xlu0 %v335, 12
    %v373 = vpop.permute.xlu0 %372
    %374 = vrot.lane.b32.xlu0 %v336, 12
    %v375 = vpop.permute.xlu0 %374
    %376 = vrot.lane.b32.xlu0 %v337, 12
    %v377 = vpop.permute.xlu0 %376
    %378 = vrot.lane.b32.xlu0 %v338, 12
    %v379 = vpop.permute.xlu0 %378
    %380 = vrot.lane.b32.xlu0 %v339, 12
    %v381 = vpop.permute.xlu0 %380
    %382 = vrot.lane.b32.xlu0 %v340, 12
    %v383 = vpop.permute.xlu0 %382
    %384 = vrot.lane.b32.xlu0 %v341, 12
    %v385 = vpop.permute.xlu0 %384
    %386 = vrot.lane.b32.xlu0 %v342, 12
    %v387 = vpop.permute.xlu0 %386
    %388 = vrot.lane.b32.xlu0 %v343, 12
    %v389 = vpop.permute.xlu0 %388
    %390 = vrot.lane.b32.xlu0 %v344, 12
    %v391 = vpop.permute.xlu0 %390
    %392 = vrot.lane.b32.xlu0 %v345, 12
    %v393 = vpop.permute.xlu0 %392
    %vm410 = vcmask 130144
    %411 = vst.msk [vmem:[#allocation3] sm:$0xff] %vm410, %v363
    %412 = vst.msk [vmem:[#allocation3 + $0x8] sm:$0xff] %vm410, %v365
    %413 = vst.msk [vmem:[#allocation3 + $0x10] sm:$0xff] %vm410, %v367
    %414 = vst.msk [vmem:[#allocation3 + $0x18] sm:$0xff] %vm410, %v369
    %415 = vst.msk [vmem:[#allocation3 + $0x20] sm:$0xff] %vm410, %v371
    %416 = vst.msk [vmem:[#allocation3 + $0x28] sm:$0xff] %vm410, %v373
    %417 = vst.msk [vmem:[#allocation3 + $0x30] sm:$0xff] %vm410, %v375
    %418 = vst.msk [vmem:[#allocation3 + $0x38] sm:$0xff] %vm410, %v377
    %419 = vst.msk [vmem:[#allocation3 + $0x40] sm:$0xff] %vm410, %v379
    %420 = vst.msk [vmem:[#allocation3 + $0x48] sm:$0xff] %vm410, %v381
    %421 = vst.msk [vmem:[#allocation3 + $0x50] sm:$0xff] %vm410, %v383
    %422 = vst.msk [vmem:[#allocation3 + $0x58] sm:$0xff] %vm410, %v385
    %423 = vst.msk [vmem:[#allocation3 + $0x60] sm:$0xff] %vm410, %v387
    %424 = vst.msk [vmem:[#allocation3 + $0x68] sm:$0xff] %vm410, %v389
    %425 = vst.msk [vmem:[#allocation3 + $0x70] sm:$0xff] %vm410, %v391
    %426 = vst.msk [vmem:[#allocation3 + $0x78] sm:$0xff] %vm410, %v393
    %v427 = vld [vmem:[%s54 + $0x1] sm:$0xff]
    %v428 = vld [vmem:[%s54 + $0x11] sm:$0xff]
    %v429 = vld [vmem:[%s54 + $0x21] sm:$0xff]
    %v430 = vld [vmem:[%s54 + $0x31] sm:$0xff]
    %v431 = vld [vmem:[%s54 + $0x41] sm:$0xff]
    %v432 = vld [vmem:[%s54 + $0x51] sm:$0xff]
    %v433 = vld [vmem:[%s54 + $0x61] sm:$0xff]
    %v434 = vld [vmem:[%s54 + $0x71] sm:$0xff]
    %v435 = vld [vmem:[%s54 + $0xa1] sm:$0xff]
    %v436 = vld [vmem:[%s54 + $0xb1] sm:$0xff]
    %v437 = vld [vmem:[%s54 + $0xc1] sm:$0xff]
    %v438 = vld [vmem:[%s54 + $0xd1] sm:$0xff]
    %v439 = vld [vmem:[%s54 + $0xe1] sm:$0xff]
    %v440 = vld [vmem:[%s54 + $0xf1] sm:$0xff]
    %v441 = vld [vmem:[%s54 + $0x101] sm:$0xff]
    %v442 = vld [vmem:[%s54 + $0x111] sm:$0xff]
    %459 = vrot.lane.b32.xlu0 %v427, 16
    %v460 = vpop.permute.xlu0 %459
    %461 = vrot.lane.b32.xlu0 %v428, 16
    %v462 = vpop.permute.xlu0 %461
    %463 = vrot.lane.b32.xlu0 %v429, 16
    %v464 = vpop.permute.xlu0 %463
    %465 = vrot.lane.b32.xlu0 %v430, 16
    %v466 = vpop.permute.xlu0 %465
    %467 = vrot.lane.b32.xlu0 %v431, 16
    %v468 = vpop.permute.xlu0 %467
    %469 = vrot.lane.b32.xlu0 %v432, 16
    %v470 = vpop.permute.xlu0 %469
    %471 = vrot.lane.b32.xlu0 %v433, 16
    %v472 = vpop.permute.xlu0 %471
    %473 = vrot.lane.b32.xlu0 %v434, 16
    %v474 = vpop.permute.xlu0 %473
    %475 = vrot.lane.b32.xlu0 %v435, 16
    %v476 = vpop.permute.xlu0 %475
    %477 = vrot.lane.b32.xlu0 %v436, 16
    %v478 = vpop.permute.xlu0 %477
    %479 = vrot.lane.b32.xlu0 %v437, 16
    %v480 = vpop.permute.xlu0 %479
    %481 = vrot.lane.b32.xlu0 %v438, 16
    %v482 = vpop.permute.xlu0 %481
    %483 = vrot.lane.b32.xlu0 %v439, 16
    %v484 = vpop.permute.xlu0 %483
    %485 = vrot.lane.b32.xlu0 %v440, 16
    %v486 = vpop.permute.xlu0 %485
    %487 = vrot.lane.b32.xlu0 %v441, 16
    %v488 = vpop.permute.xlu0 %487
    %489 = vrot.lane.b32.xlu0 %v442, 16
    %v490 = vpop.permute.xlu0 %489
    %vm507 = vcmask 162944
    %508 = vst.msk [vmem:[#allocation3] sm:$0xff] %vm507, %v460
    %509 = vst.msk [vmem:[#allocation3 + $0x8] sm:$0xff] %vm507, %v462
    %510 = vst.msk [vmem:[#allocation3 + $0x10] sm:$0xff] %vm507, %v464
    %511 = vst.msk [vmem:[#allocation3 + $0x18] sm:$0xff] %vm507, %v466
    %512 = vst.msk [vmem:[#allocation3 + $0x20] sm:$0xff] %vm507, %v468
    %513 = vst.msk [vmem:[#allocation3 + $0x28] sm:$0xff] %vm507, %v470
    %514 = vst.msk [vmem:[#allocation3 + $0x30] sm:$0xff] %vm507, %v472
    %515 = vst.msk [vmem:[#allocation3 + $0x38] sm:$0xff] %vm507, %v474
    %516 = vst.msk [vmem:[#allocation3 + $0x40] sm:$0xff] %vm507, %v476
    %517 = vst.msk [vmem:[#allocation3 + $0x48] sm:$0xff] %vm507, %v478
    %518 = vst.msk [vmem:[#allocation3 + $0x50] sm:$0xff] %vm507, %v480
    %519 = vst.msk [vmem:[#allocation3 + $0x58] sm:$0xff] %vm507, %v482
    %520 = vst.msk [vmem:[#allocation3 + $0x60] sm:$0xff] %vm507, %v484
    %521 = vst.msk [vmem:[#allocation3 + $0x68] sm:$0xff] %vm507, %v486
    %522 = vst.msk [vmem:[#allocation3 + $0x70] sm:$0xff] %vm507, %v488
    %523 = vst.msk [vmem:[#allocation3 + $0x78] sm:$0xff] %vm507, %v490
    %v524 = vld [vmem:[%s54 + $0x2] sm:$0xff]
    %v525 = vld [vmem:[%s54 + $0x12] sm:$0xff]
    %v526 = vld [vmem:[%s54 + $0x22] sm:$0xff]
    %v527 = vld [vmem:[%s54 + $0x32] sm:$0xff]
    %v528 = vld [vmem:[%s54 + $0x42] sm:$0xff]
    %v529 = vld [vmem:[%s54 + $0x52] sm:$0xff]
    %v530 = vld [vmem:[%s54 + $0x62] sm:$0xff]
    %v531 = vld [vmem:[%s54 + $0x72] sm:$0xff]
    %v532 = vld [vmem:[%s54 + $0xa2] sm:$0xff]
    %v533 = vld [vmem:[%s54 + $0xb2] sm:$0xff]
    %v534 = vld [vmem:[%s54 + $0xc2] sm:$0xff]
    %v535 = vld [vmem:[%s54 + $0xd2] sm:$0xff]
    %v536 = vld [vmem:[%s54 + $0xe2] sm:$0xff]
    %v537 = vld [vmem:[%s54 + $0xf2] sm:$0xff]
    %v538 = vld [vmem:[%s54 + $0x102] sm:$0xff]
    %v539 = vld [vmem:[%s54 + $0x112] sm:$0xff]
    %556 = vrot.lane.b32.xlu0 %v524, 20
    %v557 = vpop.permute.xlu0 %556
    %558 = vrot.lane.b32.xlu0 %v525, 20
    %v559 = vpop.permute.xlu0 %558
    %560 = vrot.lane.b32.xlu0 %v526, 20
    %v561 = vpop.permute.xlu0 %560
    %562 = vrot.lane.b32.xlu0 %v527, 20
    %v563 = vpop.permute.xlu0 %562
    %564 = vrot.lane.b32.xlu0 %v528, 20
    %v565 = vpop.permute.xlu0 %564
    %566 = vrot.lane.b32.xlu0 %v529, 20
    %v567 = vpop.permute.xlu0 %566
    %568 = vrot.lane.b32.xlu0 %v530, 20
    %v569 = vpop.permute.xlu0 %568
    %570 = vrot.lane.b32.xlu0 %v531, 20
    %v571 = vpop.permute.xlu0 %570
    %572 = vrot.lane.b32.xlu0 %v532, 20
    %v573 = vpop.permute.xlu0 %572
    %574 = vrot.lane.b32.xlu0 %v533, 20
    %v575 = vpop.permute.xlu0 %574
    %576 = vrot.lane.b32.xlu0 %v534, 20
    %v577 = vpop.permute.xlu0 %576
    %578 = vrot.lane.b32.xlu0 %v535, 20
    %v579 = vpop.permute.xlu0 %578
    %580 = vrot.lane.b32.xlu0 %v536, 20
    %v581 = vpop.permute.xlu0 %580
    %582 = vrot.lane.b32.xlu0 %v537, 20
    %v583 = vpop.permute.xlu0 %582
    %584 = vrot.lane.b32.xlu0 %v538, 20
    %v585 = vpop.permute.xlu0 %584
    %586 = vrot.lane.b32.xlu0 %v539, 20
    %v587 = vpop.permute.xlu0 %586
    %vm604 = vcmask 195744
    %605 = vst.msk [vmem:[#allocation3] sm:$0xff] %vm604, %v557
    %606 = vst.msk [vmem:[#allocation3 + $0x8] sm:$0xff] %vm604, %v559
    %607 = vst.msk [vmem:[#allocation3 + $0x10] sm:$0xff] %vm604, %v561
    %608 = vst.msk [vmem:[#allocation3 + $0x18] sm:$0xff] %vm604, %v563
    %609 = vst.msk [vmem:[#allocation3 + $0x20] sm:$0xff] %vm604, %v565
    %610 = vst.msk [vmem:[#allocation3 + $0x28] sm:$0xff] %vm604, %v567
    %611 = vst.msk [vmem:[#allocation3 + $0x30] sm:$0xff] %vm604, %v569
    %612 = vst.msk [vmem:[#allocation3 + $0x38] sm:$0xff] %vm604, %v571
    %613 = vst.msk [vmem:[#allocation3 + $0x40] sm:$0xff] %vm604, %v573
    %614 = vst.msk [vmem:[#allocation3 + $0x48] sm:$0xff] %vm604, %v575
    %615 = vst.msk [vmem:[#allocation3 + $0x50] sm:$0xff] %vm604, %v577
    %616 = vst.msk [vmem:[#allocation3 + $0x58] sm:$0xff] %vm604, %v579
    %617 = vst.msk [vmem:[#allocation3 + $0x60] sm:$0xff] %vm604, %v581
    %618 = vst.msk [vmem:[#allocation3 + $0x68] sm:$0xff] %vm604, %v583
    %619 = vst.msk [vmem:[#allocation3 + $0x70] sm:$0xff] %vm604, %v585
    %620 = vst.msk [vmem:[#allocation3 + $0x78] sm:$0xff] %vm604, %v587
    %s621 = scalar_lea.vmem [#allocation2], 32
    %v622 = vld [vmem:[%s621] sm:$0xff]
    %v623 = vld [vmem:[%s621 + $0x10] sm:$0xff]
    %v624 = vld [vmem:[%s621 + $0x20] sm:$0xff]
    %v625 = vld [vmem:[%s621 + $0x30] sm:$0xff]
    %v626 = vld [vmem:[%s621 + $0x40] sm:$0xff]
    %v627 = vld [vmem:[%s621 + $0x50] sm:$0xff]
    %v628 = vld [vmem:[%s621 + $0x60] sm:$0xff]
    %v629 = vld [vmem:[%s621 + $0x70] sm:$0xff]
    %v630 = vld [vmem:[%s621 + $0xa0] sm:$0xff]
    %v631 = vld [vmem:[%s621 + $0xb0] sm:$0xff]
    %v632 = vld [vmem:[%s621 + $0xc0] sm:$0xff]
    %v633 = vld [vmem:[%s621 + $0xd0] sm:$0xff]
    %v634 = vld [vmem:[%s621 + $0xe0] sm:$0xff]
    %v635 = vld [vmem:[%s621 + $0xf0] sm:$0xff]
    %v636 = vld [vmem:[%s621 + $0x100] sm:$0xff]
    %v637 = vld [vmem:[%s621 + $0x110] sm:$0xff]
    %654 = vrot.lane.b32.xlu0 %v622, 24
    %v655 = vpop.permute.xlu0 %654
    %656 = vrot.lane.b32.xlu0 %v623, 24
    %v657 = vpop.permute.xlu0 %656
    %658 = vrot.lane.b32.xlu0 %v624, 24
    %v659 = vpop.permute.xlu0 %658
    %660 = vrot.lane.b32.xlu0 %v625, 24
    %v661 = vpop.permute.xlu0 %660
    %662 = vrot.lane.b32.xlu0 %v626, 24
    %v663 = vpop.permute.xlu0 %662
    %664 = vrot.lane.b32.xlu0 %v627, 24
    %v665 = vpop.permute.xlu0 %664
    %666 = vrot.lane.b32.xlu0 %v628, 24
    %v667 = vpop.permute.xlu0 %666
    %668 = vrot.lane.b32.xlu0 %v629, 24
    %v669 = vpop.permute.xlu0 %668
    %670 = vrot.lane.b32.xlu0 %v630, 24
    %v671 = vpop.permute.xlu0 %670
    %672 = vrot.lane.b32.xlu0 %v631, 24
    %v673 = vpop.permute.xlu0 %672
    %674 = vrot.lane.b32.xlu0 %v632, 24
    %v675 = vpop.permute.xlu0 %674
    %676 = vrot.lane.b32.xlu0 %v633, 24
    %v677 = vpop.permute.xlu0 %676
    %678 = vrot.lane.b32.xlu0 %v634, 24
    %v679 = vpop.permute.xlu0 %678
    %680 = vrot.lane.b32.xlu0 %v635, 24
    %v681 = vpop.permute.xlu0 %680
    %682 = vrot.lane.b32.xlu0 %v636, 24
    %v683 = vpop.permute.xlu0 %682
    %684 = vrot.lane.b32.xlu0 %v637, 24
    %v685 = vpop.permute.xlu0 %684
    %vm702 = vcmask 228544
    %703 = vst.msk [vmem:[#allocation3] sm:$0xff] %vm702, %v655
    %704 = vst.msk [vmem:[#allocation3 + $0x8] sm:$0xff] %vm702, %v657
    %705 = vst.msk [vmem:[#allocation3 + $0x10] sm:$0xff] %vm702, %v659
    %706 = vst.msk [vmem:[#allocation3 + $0x18] sm:$0xff] %vm702, %v661
    %707 = vst.msk [vmem:[#allocation3 + $0x20] sm:$0xff] %vm702, %v663
    %708 = vst.msk [vmem:[#allocation3 + $0x28] sm:$0xff] %vm702, %v665
    %709 = vst.msk [vmem:[#allocation3 + $0x30] sm:$0xff] %vm702, %v667
    %710 = vst.msk [vmem:[#allocation3 + $0x38] sm:$0xff] %vm702, %v669
    %711 = vst.msk [vmem:[#allocation3 + $0x40] sm:$0xff] %vm702, %v671
    %712 = vst.msk [vmem:[#allocation3 + $0x48] sm:$0xff] %vm702, %v673
    %713 = vst.msk [vmem:[#allocation3 + $0x50] sm:$0xff] %vm702, %v675
    %714 = vst.msk [vmem:[#allocation3 + $0x58] sm:$0xff] %vm702, %v677
    %715 = vst.msk [vmem:[#allocation3 + $0x60] sm:$0xff] %vm702, %v679
    %716 = vst.msk [vmem:[#allocation3 + $0x68] sm:$0xff] %vm702, %v681
    %717 = vst.msk [vmem:[#allocation3 + $0x70] sm:$0xff] %vm702, %v683
    %718 = vst.msk [vmem:[#allocation3 + $0x78] sm:$0xff] %vm702, %v685
    %v719 = vld [vmem:[%s621 + $0x1] sm:$0xff]
    %v720 = vld [vmem:[%s621 + $0x11] sm:$0xff]
    %v721 = vld [vmem:[%s621 + $0x21] sm:$0xff]
    %v722 = vld [vmem:[%s621 + $0x31] sm:$0xff]
    %v723 = vld [vmem:[%s621 + $0x41] sm:$0xff]
    %v724 = vld [vmem:[%s621 + $0x51] sm:$0xff]
    %v725 = vld [vmem:[%s621 + $0x61] sm:$0xff]
    %v726 = vld [vmem:[%s621 + $0x71] sm:$0xff]
    %v727 = vld [vmem:[%s621 + $0xa1] sm:$0xff]
    %v728 = vld [vmem:[%s621 + $0xb1] sm:$0xff]
    %v729 = vld [vmem:[%s621 + $0xc1] sm:$0xff]
    %v730 = vld [vmem:[%s621 + $0xd1] sm:$0xff]
    %v731 = vld [vmem:[%s621 + $0xe1] sm:$0xff]
    %v732 = vld [vmem:[%s621 + $0xf1] sm:$0xff]
    %v733 = vld [vmem:[%s621 + $0x101] sm:$0xff]
    %v734 = vld [vmem:[%s621 + $0x111] sm:$0xff]
    %751 = vrot.lane.b32.xlu0 %v719, 28
    %v752 = vpop.permute.xlu0 %751
    %753 = vrot.lane.b32.xlu0 %v720, 28
    %v754 = vpop.permute.xlu0 %753
    %755 = vrot.lane.b32.xlu0 %v721, 28
    %v756 = vpop.permute.xlu0 %755
    %757 = vrot.lane.b32.xlu0 %v722, 28
    %v758 = vpop.permute.xlu0 %757
    %759 = vrot.lane.b32.xlu0 %v723, 28
    %v760 = vpop.permute.xlu0 %759
    %761 = vrot.lane.b32.xlu0 %v724, 28
    %v762 = vpop.permute.xlu0 %761
    %763 = vrot.lane.b32.xlu0 %v725, 28
    %v764 = vpop.permute.xlu0 %763
    %765 = vrot.lane.b32.xlu0 %v726, 28
    %v766 = vpop.permute.xlu0 %765
    %767 = vrot.lane.b32.xlu0 %v727, 28
    %v768 = vpop.permute.xlu0 %767
    %769 = vrot.lane.b32.xlu0 %v728, 28
    %v770 = vpop.permute.xlu0 %769
    %771 = vrot.lane.b32.xlu0 %v729, 28
    %v772 = vpop.permute.xlu0 %771
    %773 = vrot.lane.b32.xlu0 %v730, 28
    %v774 = vpop.permute.xlu0 %773
    %775 = vrot.lane.b32.xlu0 %v731, 28
    %v776 = vpop.permute.xlu0 %775
    %777 = vrot.lane.b32.xlu0 %v732, 28
    %v778 = vpop.permute.xlu0 %777
    %779 = vrot.lane.b32.xlu0 %v733, 28
    %v780 = vpop.permute.xlu0 %779
    %781 = vrot.lane.b32.xlu0 %v734, 28
    %v782 = vpop.permute.xlu0 %781
    %vm799 = vcmask 261344
    %800 = vst.msk [vmem:[#allocation3] sm:$0xff] %vm799, %v752
    %801 = vst.msk [vmem:[#allocation3 + $0x8] sm:$0xff] %vm799, %v754
    %802 = vst.msk [vmem:[#allocation3 + $0x10] sm:$0xff] %vm799, %v756
    %803 = vst.msk [vmem:[#allocation3 + $0x18] sm:$0xff] %vm799, %v758
    %804 = vst.msk [vmem:[#allocation3 + $0x20] sm:$0xff] %vm799, %v760
    %805 = vst.msk [vmem:[#allocation3 + $0x28] sm:$0xff] %vm799, %v762
    %806 = vst.msk [vmem:[#allocation3 + $0x30] sm:$0xff] %vm799, %v764
    %807 = vst.msk [vmem:[#allocation3 + $0x38] sm:$0xff] %vm799, %v766
    %808 = vst.msk [vmem:[#allocation3 + $0x40] sm:$0xff] %vm799, %v768
    %809 = vst.msk [vmem:[#allocation3 + $0x48] sm:$0xff] %vm799, %v770
    %810 = vst.msk [vmem:[#allocation3 + $0x50] sm:$0xff] %vm799, %v772
    %811 = vst.msk [vmem:[#allocation3 + $0x58] sm:$0xff] %vm799, %v774
    %812 = vst.msk [vmem:[#allocation3 + $0x60] sm:$0xff] %vm799, %v776
    %813 = vst.msk [vmem:[#allocation3 + $0x68] sm:$0xff] %vm799, %v778
    %814 = vst.msk [vmem:[#allocation3 + $0x70] sm:$0xff] %vm799, %v780
    %815 = vst.msk [vmem:[#allocation3 + $0x78] sm:$0xff] %vm799, %v782
    %v816 = vld [vmem:[%s621 + $0x2] sm:$0xff]
    %v817 = vld [vmem:[%s621 + $0x12] sm:$0xff]
    %v818 = vld [vmem:[%s621 + $0x22] sm:$0xff]
    %v819 = vld [vmem:[%s621 + $0x32] sm:$0xff]
    %v820 = vld [vmem:[%s621 + $0x42] sm:$0xff]
    %v821 = vld [vmem:[%s621 + $0x52] sm:$0xff]
    %v822 = vld [vmem:[%s621 + $0x62] sm:$0xff]
    %v823 = vld [vmem:[%s621 + $0x72] sm:$0xff]
    %v824 = vld [vmem:[%s621 + $0xa2] sm:$0xff]
    %v825 = vld [vmem:[%s621 + $0xb2] sm:$0xff]
    %v826 = vld [vmem:[%s621 + $0xc2] sm:$0xff]
    %v827 = vld [vmem:[%s621 + $0xd2] sm:$0xff]
    %v828 = vld [vmem:[%s621 + $0xe2] sm:$0xff]
    %v829 = vld [vmem:[%s621 + $0xf2] sm:$0xff]
    %v830 = vld [vmem:[%s621 + $0x102] sm:$0xff]
    %v831 = vld [vmem:[%s621 + $0x112] sm:$0xff]
    %848 = vrot.lane.b32.xlu0 %v816, 32
    %v849 = vpop.permute.xlu0 %848
    %850 = vrot.lane.b32.xlu0 %v817, 32
    %v851 = vpop.permute.xlu0 %850
    %852 = vrot.lane.b32.xlu0 %v818, 32
    %v853 = vpop.permute.xlu0 %852
    %854 = vrot.lane.b32.xlu0 %v819, 32
    %v855 = vpop.permute.xlu0 %854
    %856 = vrot.lane.b32.xlu0 %v820, 32
    %v857 = vpop.permute.xlu0 %856
    %858 = vrot.lane.b32.xlu0 %v821, 32
    %v859 = vpop.permute.xlu0 %858
    %860 = vrot.lane.b32.xlu0 %v822, 32
    %v861 = vpop.permute.xlu0 %860
    %862 = vrot.lane.b32.xlu0 %v823, 32
    %v863 = vpop.permute.xlu0 %862
    %864 = vrot.lane.b32.xlu0 %v824, 32
    %v865 = vpop.permute.xlu0 %864
    %866 = vrot.lane.b32.xlu0 %v825, 32
    %v867 = vpop.permute.xlu0 %866
    %868 = vrot.lane.b32.xlu0 %v826, 32
    %v869 = vpop.permute.xlu0 %868
    %870 = vrot.lane.b32.xlu0 %v827, 32
    %v871 = vpop.permute.xlu0 %870
    %872 = vrot.lane.b32.xlu0 %v828, 32
    %v873 = vpop.permute.xlu0 %872
    %874 = vrot.lane.b32.xlu0 %v829, 32
    %v875 = vpop.permute.xlu0 %874
    %876 = vrot.lane.b32.xlu0 %v830, 32
    %v877 = vpop.permute.xlu0 %876
    %878 = vrot.lane.b32.xlu0 %v831, 32
    %v879 = vpop.permute.xlu0 %878
    %vm896 = vcmask 294144
    %897 = vst.msk [vmem:[#allocation3] sm:$0xff] %vm896, %v849
    %898 = vst.msk [vmem:[#allocation3 + $0x8] sm:$0xff] %vm896, %v851
    %899 = vst.msk [vmem:[#allocation3 + $0x10] sm:$0xff] %vm896, %v853
    %900 = vst.msk [vmem:[#allocation3 + $0x18] sm:$0xff] %vm896, %v855
    %901 = vst.msk [vmem:[#allocation3 + $0x20] sm:$0xff] %vm896, %v857
    %902 = vst.msk [vmem:[#allocation3 + $0x28] sm:$0xff] %vm896, %v859
    %903 = vst.msk [vmem:[#allocation3 + $0x30] sm:$0xff] %vm896, %v861
    %904 = vst.msk [vmem:[#allocation3 + $0x38] sm:$0xff] %vm896, %v863
    %905 = vst.msk [vmem:[#allocation3 + $0x40] sm:$0xff] %vm896, %v865
    %906 = vst.msk [vmem:[#allocation3 + $0x48] sm:$0xff] %vm896, %v867
    %907 = vst.msk [vmem:[#allocation3 + $0x50] sm:$0xff] %vm896, %v869
    %908 = vst.msk [vmem:[#allocation3 + $0x58] sm:$0xff] %vm896, %v871
    %909 = vst.msk [vmem:[#allocation3 + $0x60] sm:$0xff] %vm896, %v873
    %910 = vst.msk [vmem:[#allocation3 + $0x68] sm:$0xff] %vm896, %v875
    %911 = vst.msk [vmem:[#allocation3 + $0x70] sm:$0xff] %vm896, %v877
    %912 = vst.msk [vmem:[#allocation3 + $0x78] sm:$0xff] %vm896, %v879
    %v913 = vld [vmem:[#allocation3] sm:$0xff]
    %v914 = vld [vmem:[#allocation3 + $0x8] sm:$0xff]
    %v915 = vld [vmem:[#allocation3 + $0x10] sm:$0xff]
    %v916 = vld [vmem:[#allocation3 + $0x18] sm:$0xff]
    %v917 = vld [vmem:[#allocation3 + $0x20] sm:$0xff]
    %v918 = vld [vmem:[#allocation3 + $0x28] sm:$0xff]
    %v919 = vld [vmem:[#allocation3 + $0x30] sm:$0xff]
    %v920 = vld [vmem:[#allocation3 + $0x38] sm:$0xff]
    %v921 = vld [vmem:[#allocation3 + $0x40] sm:$0xff]
    %v922 = vld [vmem:[#allocation3 + $0x48] sm:$0xff]
    %v923 = vld [vmem:[#allocation3 + $0x50] sm:$0xff]
    %v924 = vld [vmem:[#allocation3 + $0x58] sm:$0xff]
    %v925 = vld [vmem:[#allocation3 + $0x60] sm:$0xff]
    %v926 = vld [vmem:[#allocation3 + $0x68] sm:$0xff]
    %v927 = vld [vmem:[#allocation3 + $0x70] sm:$0xff]
    %v928 = vld [vmem:[#allocation3 + $0x78] sm:$0xff]
    %v929 = vld [vmem:[%s1] sm:$0xff]
    %v930 = vld [vmem:[%s1 + $0x8] sm:$0xff]
    %v931 = vld [vmem:[%s1 + $0x10] sm:$0xff]
    %v932 = vld [vmem:[%s1 + $0x18] sm:$0xff]
    %v933 = vld [vmem:[%s1 + $0x20] sm:$0xf]
    %vm934 = vcmask 293888
    %v936 = vsel %vm934, %v913, 0
    %v939 = vsel %vm934, %v914, 0
    %v942 = vsel %vm934, %v915, 0
    %v945 = vsel %vm934, %v916, 0
    %v948 = vsel %vm934, %v917, 0
    %v951 = vsel %vm934, %v918, 0
    %v954 = vsel %vm934, %v919, 0
    %v957 = vsel %vm934, %v920, 0
    %v960 = vsel %vm934, %v921, 0
    %v963 = vsel %vm934, %v922, 0
    %v966 = vsel %vm934, %v923, 0
    %v969 = vsel %vm934, %v924, 0
    %v972 = vsel %vm934, %v925, 0
    %v975 = vsel %vm934, %v926, 0
    %v978 = vsel %vm934, %v927, 0
    %v981 = vsel %vm934, %v928, 0
    %vm983 = vcmask 1043456
    %v985 = vsel %vm983, %v933, 0
    %987 = vmatprep.subr.mxu0 0.0
    %988 = vmatpush1.msra.mxu0 0.0
    %989 = vmatprep.subr.mxu0 0.0
    %990 = vmatpush1.msra.mxu0 0.0
    %991 = vmatprep.subr.mxu0 0.0
    %992 = vmatpush1.msra.mxu0 0.0
    %993 = vmatprep.subr.mxu0 0.0
    %994 = vmatpush1.msra.mxu0 0.0
    %995 = vmatprep.subr.mxu0 0.0
    %996 = vmatpush1.msra.mxu0 0.0
    %997 = vmatprep.subr.mxu0 0.0
    %998 = vmatpush1.msra.mxu0 0.0
    %999 = vmatprep.subr.mxu0 0.0
    %1000 = vmatpush1.msra.mxu0 0.0
    %1001 = vmatprep.subr.mxu0 0.0
    %1002 = vmatpush1.msra.mxu0 0.0
    %1003 = vmatprep.subr.mxu0 0.0
    %1004 = vmatpush1.msra.mxu0 0.0
    %1005 = vmatprep.subr.mxu0 0.0
    %1006 = vmatpush1.msra.mxu0 0.0
    %1007 = vmatprep.subr.mxu0 0.0
    %1008 = vmatpush1.msra.mxu0 0.0
    %1009 = vmatprep.subr.mxu0 0.0
    %1010 = vmatpush1.msra.mxu0 %v985
    %1011 = vmatprep.subr.mxu0 0.0
    %1012 = vmatpush1.msra.mxu0 %v932
    %1013 = vmatprep.subr.mxu0 0.0
    %1014 = vmatpush1.msra.mxu0 %v931
    %1015 = vmatprep.subr.mxu0 0.0
    %1016 = vmatpush1.msra.mxu0 %v930
    %1017 = vmatprep.subr.mxu0 0.0
    %1018 = vmatpush1.msra.mxu0 %v929
    %1019 = vmatprep.subr.mxu0 0.0
    %1020 = vmatpush2.msra.mxu0 0.0
    %1021 = vmatprep.subr.mxu0 0.0
    %1022 = vmatpush2.msra.mxu0 0.0
    %1023 = vmatprep.subr.mxu0 0.0
    %1024 = vmatpush2.msra.mxu0 0.0
    %1025 = vmatprep.subr.mxu0 0.0
    %1026 = vmatpush2.msra.mxu0 0.0
    %1027 = vmatprep.subr.mxu0 0.0
    %1028 = vmatpush2.msra.mxu0 0.0
    %1029 = vmatprep.subr.mxu0 0.0
    %1030 = vmatpush2.msra.mxu0 0.0
    %1031 = vmatprep.subr.mxu0 0.0
    %1032 = vmatpush2.msra.mxu0 0.0
    %1033 = vmatprep.subr.mxu0 0.0
    %1034 = vmatpush2.msra.mxu0 0.0
    %1035 = vmatprep.subr.mxu0 0.0
    %1036 = vmatpush2.msra.mxu0 0.0
    %1037 = vmatprep.subr.mxu0 0.0
    %1038 = vmatpush2.msra.mxu0 0.0
    %1039 = vmatprep.subr.mxu0 0.0
    %1040 = vmatpush2.msra.mxu0 0.0
    %1041 = vmatprep.subr.mxu0 0.0
    %1042 = vmatpush2.msra.mxu0 0.0
    %1043 = vmatprep.subr.mxu0 0.0
    %1044 = vmatpush2.msra.mxu0 0.0
    %1045 = vmatprep.subr.mxu0 0.0
    %1046 = vmatpush2.msra.mxu0 0.0
    %1047 = vmatprep.subr.mxu0 0.0
    %1048 = vmatpush2.msra.mxu0 0.0
    %1049 = vmatprep.subr.mxu0 0.0
    %1050 = vmatpush2.msra.mxu0 0.0
    %1051 = vmatprep.mubr.f32.mxu0 0.0
    %1052 = vmatmul.mubr.f32.gmra.mxu0 %v936
    %v1053 = vpop.f32.mrf.mxu0
    %v1054 = vadd.f32 0.0, %v1053
    %v1055 = vpop.f32.mrf.mxu0
    %1056 = vmatprep.mubr.f32.mxu0 0.0
    %1057 = vmatmul.mubr.f32.gmra.mxu0 %v939
    %v1058 = vpop.f32.mrf.mxu0
    %v1059 = vadd.f32 0.0, %v1058
    %v1060 = vpop.f32.mrf.mxu0
    %1061 = vmatprep.mubr.f32.mxu0 0.0
    %1062 = vmatmul.mubr.f32.gmra.mxu0 %v942
    %v1063 = vpop.f32.mrf.mxu0
    %v1064 = vadd.f32 0.0, %v1063
    %v1065 = vpop.f32.mrf.mxu0
    %1066 = vmatprep.mubr.f32.mxu0 0.0
    %1067 = vmatmul.mubr.f32.gmra.mxu0 %v945
    %v1068 = vpop.f32.mrf.mxu0
    %v1069 = vadd.f32 0.0, %v1068
    %v1070 = vpop.f32.mrf.mxu0
    %1071 = vmatprep.mubr.f32.mxu0 0.0
    %1072 = vmatmul.mubr.f32.gmra.mxu0 %v948
    %v1073 = vpop.f32.mrf.mxu0
    %v1074 = vadd.f32 0.0, %v1073
    %v1075 = vpop.f32.mrf.mxu0
    %1076 = vmatprep.mubr.f32.mxu0 0.0
    %1077 = vmatmul.mubr.f32.gmra.mxu0 %v951
    %v1078 = vpop.f32.mrf.mxu0
    %v1079 = vadd.f32 0.0, %v1078
    %v1080 = vpop.f32.mrf.mxu0
    %1081 = vmatprep.mubr.f32.mxu0 0.0
    %1082 = vmatmul.mubr.f32.gmra.mxu0 %v954
    %v1083 = vpop.f32.mrf.mxu0
    %v1084 = vadd.f32 0.0, %v1083
    %v1085 = vpop.f32.mrf.mxu0
    %1086 = vmatprep.mubr.f32.mxu0 0.0
    %1087 = vmatmul.mubr.f32.gmra.mxu0 %v957
    %v1088 = vpop.f32.mrf.mxu0
    %v1089 = vadd.f32 0.0, %v1088
    %v1090 = vpop.f32.mrf.mxu0
    %1091 = vmatprep.mubr.f32.mxu0 0.0
    %1092 = vmatmul.mubr.f32.gmra.mxu0 %v960
    %v1093 = vpop.f32.mrf.mxu0
    %v1094 = vadd.f32 0.0, %v1093
    %v1095 = vpop.f32.mrf.mxu0
    %1096 = vmatprep.mubr.f32.mxu0 0.0
    %1097 = vmatmul.mubr.f32.gmra.mxu0 %v963
    %v1098 = vpop.f32.mrf.mxu0
    %v1099 = vadd.f32 0.0, %v1098
    %v1100 = vpop.f32.mrf.mxu0
    %1101 = vmatprep.mubr.f32.mxu0 0.0
    %1102 = vmatmul.mubr.f32.gmra.mxu0 %v966
    %v1103 = vpop.f32.mrf.mxu0
    %v1104 = vadd.f32 0.0, %v1103
    %v1105 = vpop.f32.mrf.mxu0
    %1106 = vmatprep.mubr.f32.mxu0 0.0
    %1107 = vmatmul.mubr.f32.gmra.mxu0 %v969
    %v1108 = vpop.f32.mrf.mxu0
    %v1109 = vadd.f32 0.0, %v1108
    %v1110 = vpop.f32.mrf.mxu0
    %1111 = vmatprep.mubr.f32.mxu0 0.0
    %1112 = vmatmul.mubr.f32.gmra.mxu0 %v972
    %v1113 = vpop.f32.mrf.mxu0
    %v1114 = vadd.f32 0.0, %v1113
    %v1115 = vpop.f32.mrf.mxu0
    %1116 = vmatprep.mubr.f32.mxu0 0.0
    %1117 = vmatmul.mubr.f32.gmra.mxu0 %v975
    %v1118 = vpop.f32.mrf.mxu0
    %v1119 = vadd.f32 0.0, %v1118
    %v1120 = vpop.f32.mrf.mxu0
    %1121 = vmatprep.mubr.f32.mxu0 0.0
    %1122 = vmatmul.mubr.f32.gmra.mxu0 %v978
    %v1123 = vpop.f32.mrf.mxu0
    %v1124 = vadd.f32 0.0, %v1123
    %v1125 = vpop.f32.mrf.mxu0
    %1126 = vmatprep.mubr.f32.mxu0 0.0
    %1127 = vmatmul.mubr.f32.gmra.mxu0 %v981
    %v1128 = vpop.f32.mrf.mxu0
    %v1129 = vadd.f32 0.0, %v1128
    %v1130 = vpop.f32.mrf.mxu0
    %1131 = vdwg.mxu0
    %vm1132 = vcmask 130048
    %v1133 = vsel %vm1132, %v1054, 0.0
    %v1134 = vsel %vm1132, %v1059, 0.0
    %v1135 = vadd.f32 %v1133, %v1134
    %v1136 = vsel %vm1132, %v1064, 0.0
    %v1137 = vadd.f32 %v1135, %v1136
    %v1138 = vsel %vm1132, %v1069, 0.0
    %v1139 = vadd.f32 %v1137, %v1138
    %v1140 = vsel %vm1132, %v1074, 0.0
    %v1141 = vadd.f32 %v1139, %v1140
    %v1142 = vsel %vm1132, %v1079, 0.0
    %v1143 = vadd.f32 %v1141, %v1142
    %v1144 = vsel %vm1132, %v1084, 0.0
    %v1145 = vadd.f32 %v1143, %v1144
    %v1146 = vsel %vm1132, %v1089, 0.0
    %v1147 = vadd.f32 %v1145, %v1146
    %v1148 = vsel %vm1132, %v1094, 0.0
    %v1149 = vadd.f32 %v1147, %v1148
    %v1150 = vsel %vm1132, %v1099, 0.0
    %v1151 = vadd.f32 %v1149, %v1150
    %v1152 = vsel %vm1132, %v1104, 0.0
    %v1153 = vadd.f32 %v1151, %v1152
    %v1154 = vsel %vm1132, %v1109, 0.0
    %v1155 = vadd.f32 %v1153, %v1154
    %v1156 = vsel %vm1132, %v1114, 0.0
    %v1157 = vadd.f32 %v1155, %v1156
    %v1158 = vsel %vm1132, %v1119, 0.0
    %v1159 = vadd.f32 %v1157, %v1158
    %v1160 = vsel %vm1132, %v1124, 0.0
    %v1161 = vadd.f32 %v1159, %v1160
    %v1162 = vsel %vm1132, %v1129, 0.0
    %v1163 = vadd.f32 %v1161, %v1162
    %v1164 = vrot.slane %v1163, 4
    %v1165 = vadd.f32 %v1163, %v1164
    %v1166 = vrot.slane %v1165, 2
    %v1167 = vadd.f32 %v1165, %v1166
    %v1168 = vrot.slane %v1167, 1
    %v1169 = vadd.f32 %v1167, %v1168
    %v1170 = vrcp.pop 128.0
    %v1171 = vmul.f32 %v1169, %v1170
    %v1172 = vsub.f32 %v1054, %v1171
    %v1173 = vsub.f32 %v1059, %v1171
    %v1174 = vsub.f32 %v1064, %v1171
    %v1175 = vsub.f32 %v1069, %v1171
    %v1176 = vsub.f32 %v1074, %v1171
    %v1177 = vsub.f32 %v1079, %v1171
    %v1178 = vsub.f32 %v1084, %v1171
    %v1179 = vsub.f32 %v1089, %v1171
    %v1180 = vsub.f32 %v1094, %v1171
    %v1181 = vsub.f32 %v1099, %v1171
    %v1182 = vsub.f32 %v1104, %v1171
    %v1183 = vsub.f32 %v1109, %v1171
    %v1184 = vsub.f32 %v1114, %v1171
    %v1185 = vsub.f32 %v1119, %v1171
    %v1186 = vsub.f32 %v1124, %v1171
    %v1187 = vsub.f32 %v1129, %v1171
    %v1188 = vmul.f32 %v1172, %v1172
    %v1189 = vmul.f32 %v1173, %v1173
    %v1190 = vmul.f32 %v1174, %v1174
    %v1191 = vmul.f32 %v1175, %v1175
    %v1192 = vmul.f32 %v1176, %v1176
    %v1193 = vmul.f32 %v1177, %v1177
    %v1194 = vmul.f32 %v1178, %v1178
    %v1195 = vmul.f32 %v1179, %v1179
    %v1196 = vmul.f32 %v1180, %v1180
    %v1197 = vmul.f32 %v1181, %v1181
    %v1198 = vmul.f32 %v1182, %v1182
    %v1199 = vmul.f32 %v1183, %v1183
    %v1200 = vmul.f32 %v1184, %v1184
    %v1201 = vmul.f32 %v1185, %v1185
    %v1202 = vmul.f32 %v1186, %v1186
    %v1203 = vmul.f32 %v1187, %v1187
    %v1204 = vsel %vm1132, %v1188, 0.0
    %v1205 = vsel %vm1132, %v1189, 0.0
    %v1206 = vadd.f32 %v1204, %v1205
    %v1207 = vsel %vm1132, %v1190, 0.0
    %v1208 = vadd.f32 %v1206, %v1207
    %v1209 = vsel %vm1132, %v1191, 0.0
    %v1210 = vadd.f32 %v1208, %v1209
    %v1211 = vsel %vm1132, %v1192, 0.0
    %v1212 = vadd.f32 %v1210, %v1211
    %v1213 = vsel %vm1132, %v1193, 0.0
    %v1214 = vadd.f32 %v1212, %v1213
    %v1215 = vsel %vm1132, %v1194, 0.0
    %v1216 = vadd.f32 %v1214, %v1215
    %v1217 = vsel %vm1132, %v1195, 0.0
    %v1218 = vadd.f32 %v1216, %v1217
    %v1219 = vsel %vm1132, %v1196, 0.0
    %v1220 = vadd.f32 %v1218, %v1219
    %v1221 = vsel %vm1132, %v1197, 0.0
    %v1222 = vadd.f32 %v1220, %v1221
    %v1223 = vsel %vm1132, %v1198, 0.0
    %v1224 = vadd.f32 %v1222, %v1223
    %v1225 = vsel %vm1132, %v1199, 0.0
    %v1226 = vadd.f32 %v1224, %v1225
    %v1227 = vsel %vm1132, %v1200, 0.0
    %v1228 = vadd.f32 %v1226, %v1227
    %v1229 = vsel %vm1132, %v1201, 0.0
    %v1230 = vadd.f32 %v1228, %v1229
    %v1231 = vsel %vm1132, %v1202, 0.0
    %v1232 = vadd.f32 %v1230, %v1231
    %v1233 = vsel %vm1132, %v1203, 0.0
    %v1234 = vadd.f32 %v1232, %v1233
    %v1235 = vrot.slane %v1234, 4
    %v1236 = vadd.f32 %v1234, %v1235
    %v1237 = vrot.slane %v1236, 2
    %v1238 = vadd.f32 %v1236, %v1237
    %v1239 = vrot.slane %v1238, 1
    %v1240 = vadd.f32 %v1238, %v1239
    %v1241 = vmul.f32 %v1240, %v1170
    %v1242 = vld [vmem:[%s2] sm:$0x1]
    %v1243 = vadd.f32 %v1241, 1e-05
    %v1244 = vrsqrt.pop %v1243
    %v1245 = vmul.f32 %v1242, %v1244
    %v1246 = vld [vmem:[%s3] sm:$0x1]
    %v1247 = vmul.f32 %v1171, %v1245
    %v1248 = vsub.f32 %v1246, %v1247
    %v1250 = vlaneseq
    %v1251 = vshrl.u32 %v1250, 7
    %v1252 = vsub.s32 0, %v1251
    %v1253 = vrot.slane %v1245, %v1252
    %v1255 = vmul.f32 %v1054, %v1253
    %v1256 = vmul.f32 %v1059, %v1253
    %v1257 = vmul.f32 %v1064, %v1253
    %v1258 = vmul.f32 %v1069, %v1253
    %v1259 = vmul.f32 %v1074, %v1253
    %v1260 = vmul.f32 %v1079, %v1253
    %v1261 = vmul.f32 %v1084, %v1253
    %v1262 = vmul.f32 %v1089, %v1253
    %v1263 = vmul.f32 %v1094, %v1253
    %v1264 = vmul.f32 %v1099, %v1253
    %v1265 = vmul.f32 %v1104, %v1253
    %v1266 = vmul.f32 %v1109, %v1253
    %v1267 = vmul.f32 %v1114, %v1253
    %v1268 = vmul.f32 %v1119, %v1253
    %v1269 = vmul.f32 %v1124, %v1253
    %v1270 = vmul.f32 %v1129, %v1253
    %v1272 = vlaneseq
    %v1273 = vshrl.u32 %v1272, 7
    %v1274 = vsub.s32 0, %v1273
    %v1275 = vrot.slane %v1248, %v1274
    %v1277 = vadd.f32 %v1255, %v1275
    %v1278 = vadd.f32 %v1256, %v1275
    %v1279 = vadd.f32 %v1257, %v1275
    %v1280 = vadd.f32 %v1258, %v1275
    %v1281 = vadd.f32 %v1259, %v1275
    %v1282 = vadd.f32 %v1260, %v1275
    %v1283 = vadd.f32 %v1261, %v1275
    %v1284 = vadd.f32 %v1262, %v1275
    %v1285 = vadd.f32 %v1263, %v1275
    %v1286 = vadd.f32 %v1264, %v1275
    %v1287 = vadd.f32 %v1265, %v1275
    %v1288 = vadd.f32 %v1266, %v1275
    %v1289 = vadd.f32 %v1267, %v1275
    %v1290 = vadd.f32 %v1268, %v1275
    %v1291 = vadd.f32 %v1269, %v1275
    %v1292 = vadd.f32 %v1270, %v1275
    %v1293 = vmul.f32 %v1277, 0.2
    %v1294 = vmul.f32 %v1278, 0.2
    %v1295 = vmul.f32 %v1279, 0.2
    %v1296 = vmul.f32 %v1280, 0.2
    %v1297 = vmul.f32 %v1281, 0.2
    %v1298 = vmul.f32 %v1282, 0.2
    %v1299 = vmul.f32 %v1283, 0.2
    %v1300 = vmul.f32 %v1284, 0.2
    %v1301 = vmul.f32 %v1285, 0.2
    %v1302 = vmul.f32 %v1286, 0.2
    %v1303 = vmul.f32 %v1287, 0.2
    %v1304 = vmul.f32 %v1288, 0.2
    %v1305 = vmul.f32 %v1289, 0.2
    %v1306 = vmul.f32 %v1290, 0.2
    %v1307 = vmul.f32 %v1291, 0.2
    %v1308 = vmul.f32 %v1292, 0.2
    %v1309 = vmax.f32 %v1277, %v1293
    %v1310 = vmax.f32 %v1278, %v1294
    %v1311 = vmax.f32 %v1279, %v1295
    %v1312 = vmax.f32 %v1280, %v1296
    %v1313 = vmax.f32 %v1281, %v1297
    %v1314 = vmax.f32 %v1282, %v1298
    %v1315 = vmax.f32 %v1283, %v1299
    %v1316 = vmax.f32 %v1284, %v1300
    %v1317 = vmax.f32 %v1285, %v1301
    %v1318 = vmax.f32 %v1286, %v1302
    %v1319 = vmax.f32 %v1287, %v1303
    %v1320 = vmax.f32 %v1288, %v1304
    %v1321 = vmax.f32 %v1289, %v1305
    %v1322 = vmax.f32 %v1290, %v1306
    %v1323 = vmax.f32 %v1291, %v1307
    %v1324 = vmax.f32 %v1292, %v1308
    %1325 = vst.msk [vmem:[#allocation4] sm:$0xff] %vm1132, 0.0
    %vm1326 = vcmask 123904
    %1327 = vst.msk [vmem:[#allocation4 + $0x8] sm:$0x3] %vm1326, 0.0
    %1328 = vst.msk [vmem:[#allocation4 + $0xa0] sm:$0xff] %vm1132, 0.0
    %1329 = vst.msk [vmem:[#allocation4 + $0xa8] sm:$0x3] %vm1326, 0.0
    %s1330 = scalar_lea.vmem [#allocation4], 144
    %1331 = vst.msk [vmem:[%s1330] sm:$0xff] %vm1132, 0.0
    %1332 = vst.msk [vmem:[%s1330 + $0x8] sm:$0x3] %vm1326, 0.0
    %1333 = vst.msk [vmem:[%s1330 + $0xa0] sm:$0xff] %vm1132, 0.0
    %1334 = vst.msk [vmem:[%s1330 + $0xa8] sm:$0x3] %vm1326, 0.0
    %s1335 = scalar_lea.vmem [#allocation4], 16
    %vm1336 = vcmask 122880
    %1337 = vst.msk [vmem:[%s1335] sm:$0x1] %vm1336, 0.0
    %1338 = vst.msk [vmem:[%s1335 + $0x10] sm:$0x1] %vm1336, 0.0
    %1339 = vst.msk [vmem:[%s1335 + $0x20] sm:$0x1] %vm1336, 0.0
    %1340 = vst.msk [vmem:[%s1335 + $0x30] sm:$0x1] %vm1336, 0.0
    %1341 = vst.msk [vmem:[%s1335 + $0x40] sm:$0x1] %vm1336, 0.0
    %1342 = vst.msk [vmem:[%s1335 + $0x50] sm:$0x1] %vm1336, 0.0
    %1343 = vst.msk [vmem:[%s1335 + $0x60] sm:$0x1] %vm1336, 0.0
    %1344 = vst.msk [vmem:[%s1335 + $0x70] sm:$0x1] %vm1336, 0.0
    %1345 = vst.msk [vmem:[%s1335 + $0xa0] sm:$0x1] %vm1336, 0.0
    %1346 = vst.msk [vmem:[%s1335 + $0xb0] sm:$0x1] %vm1336, 0.0
    %1347 = vst.msk [vmem:[%s1335 + $0xc0] sm:$0x1] %vm1336, 0.0
    %1348 = vst.msk [vmem:[%s1335 + $0xd0] sm:$0x1] %vm1336, 0.0
    %1349 = vst.msk [vmem:[%s1335 + $0xe0] sm:$0x1] %vm1336, 0.0
    %1350 = vst.msk [vmem:[%s1335 + $0xf0] sm:$0x1] %vm1336, 0.0
    %1351 = vst.msk [vmem:[%s1335 + $0x100] sm:$0x1] %vm1336, 0.0
    %1352 = vst.msk [vmem:[%s1335 + $0x110] sm:$0x1] %vm1336, 0.0
    %1353 = vst.msk [vmem:[%s1335 + $0x9] sm:$0x1] %vm1336, 0.0
    %1354 = vst.msk [vmem:[%s1335 + $0x19] sm:$0x1] %vm1336, 0.0
    %1355 = vst.msk [vmem:[%s1335 + $0x29] sm:$0x1] %vm1336, 0.0
    %1356 = vst.msk [vmem:[%s1335 + $0x39] sm:$0x1] %vm1336, 0.0
    %1357 = vst.msk [vmem:[%s1335 + $0x49] sm:$0x1] %vm1336, 0.0
    %1358 = vst.msk [vmem:[%s1335 + $0x59] sm:$0x1] %vm1336, 0.0
    %1359 = vst.msk [vmem:[%s1335 + $0x69] sm:$0x1] %vm1336, 0.0
    %1360 = vst.msk [vmem:[%s1335 + $0x79] sm:$0x1] %vm1336, 0.0
    %1361 = vst.msk [vmem:[%s1335 + $0xa9] sm:$0x1] %vm1336, 0.0
    %1362 = vst.msk [vmem:[%s1335 + $0xb9] sm:$0x1] %vm1336, 0.0
    %1363 = vst.msk [vmem:[%s1335 + $0xc9] sm:$0x1] %vm1336, 0.0
    %1364 = vst.msk [vmem:[%s1335 + $0xd9] sm:$0x1] %vm1336, 0.0
    %1365 = vst.msk [vmem:[%s1335 + $0xe9] sm:$0x1] %vm1336, 0.0
    %1366 = vst.msk [vmem:[%s1335 + $0xf9] sm:$0x1] %vm1336, 0.0
    %1367 = vst.msk [vmem:[%s1335 + $0x109] sm:$0x1] %vm1336, 0.0
    %1368 = vst.msk [vmem:[%s1335 + $0x119] sm:$0x1] %vm1336, 0.0
    %1369 = vst.msk [vmem:[%s1335 + $0x1] sm:$0xff] %vm1132, %v1309
    %1370 = vst.msk [vmem:[%s1335 + $0x11] sm:$0xff] %vm1132, %v1310
    %1371 = vst.msk [vmem:[%s1335 + $0x21] sm:$0xff] %vm1132, %v1311
    %1372 = vst.msk [vmem:[%s1335 + $0x31] sm:$0xff] %vm1132, %v1312
    %1373 = vst.msk [vmem:[%s1335 + $0x41] sm:$0xff] %vm1132, %v1313
    %1374 = vst.msk [vmem:[%s1335 + $0x51] sm:$0xff] %vm1132, %v1314
    %1375 = vst.msk [vmem:[%s1335 + $0x61] sm:$0xff] %vm1132, %v1315
    %1376 = vst.msk [vmem:[%s1335 + $0x71] sm:$0xff] %vm1132, %v1316
    %1377 = vst.msk [vmem:[%s1335 + $0xa1] sm:$0xff] %vm1132, %v1317
    %1378 = vst.msk [vmem:[%s1335 + $0xb1] sm:$0xff] %vm1132, %v1318
    %1379 = vst.msk [vmem:[%s1335 + $0xc1] sm:$0xff] %vm1132, %v1319
    %1380 = vst.msk [vmem:[%s1335 + $0xd1] sm:$0xff] %vm1132, %v1320
    %1381 = vst.msk [vmem:[%s1335 + $0xe1] sm:$0xff] %vm1132, %v1321
    %1382 = vst.msk [vmem:[%s1335 + $0xf1] sm:$0xff] %vm1132, %v1322
    %1383 = vst.msk [vmem:[%s1335 + $0x101] sm:$0xff] %vm1132, %v1323
    %1384 = vst.msk [vmem:[%s1335 + $0x111] sm:$0xff] %vm1132, %v1324
    %v1385 = vld [vmem:[#allocation4] sm:$0xff]
    %v1386 = vld [vmem:[#allocation4 + $0x10] sm:$0xff]
    %v1387 = vld [vmem:[#allocation4 + $0x20] sm:$0xff]
    %v1388 = vld [vmem:[#allocation4 + $0x30] sm:$0xff]
    %v1389 = vld [vmem:[#allocation4 + $0x40] sm:$0xff]
    %v1390 = vld [vmem:[#allocation4 + $0x50] sm:$0xff]
    %v1391 = vld [vmem:[#allocation4 + $0x60] sm:$0xff]
    %v1392 = vld [vmem:[#allocation4 + $0x70] sm:$0xff]
    %v1393 = vld [vmem:[#allocation4 + $0xa0] sm:$0xff]
    %v1394 = vld [vmem:[#allocation4 + $0xb0] sm:$0xff]
    %v1395 = vld [vmem:[#allocation4 + $0xc0] sm:$0xff]
    %v1396 = vld [vmem:[#allocation4 + $0xd0] sm:$0xff]
    %v1397 = vld [vmem:[#allocation4 + $0xe0] sm:$0xff]
    %v1398 = vld [vmem:[#allocation4 + $0xf0] sm:$0xff]
    %v1399 = vld [vmem:[#allocation4 + $0x100] sm:$0xff]
    %v1400 = vld [vmem:[#allocation4 + $0x110] sm:$0xff]
    %1401 = vst.msk [vmem:[#allocation5] sm:$0xff] %vm1132, %v1385
    %1402 = vst.msk [vmem:[#allocation5 + $0x10] sm:$0xff] %vm1132, %v1386
    %1403 = vst.msk [vmem:[#allocation5 + $0x20] sm:$0xff] %vm1132, %v1387
    %1404 = vst.msk [vmem:[#allocation5 + $0x30] sm:$0xff] %vm1132, %v1388
    %1405 = vst.msk [vmem:[#allocation5 + $0x40] sm:$0xff] %vm1132, %v1389
    %1406 = vst.msk [vmem:[#allocation5 + $0x50] sm:$0xff] %vm1132, %v1390
    %1407 = vst.msk [vmem:[#allocation5 + $0x60] sm:$0xff] %vm1132, %v1391
    %1408 = vst.msk [vmem:[#allocation5 + $0x70] sm:$0xff] %vm1132, %v1392
    %1409 = vst.msk [vmem:[#allocation5 + $0x80] sm:$0xff] %vm1132, %v1393
    %1410 = vst.msk [vmem:[#allocation5 + $0x90] sm:$0xff] %vm1132, %v1394
    %1411 = vst.msk [vmem:[#allocation5 + $0xa0] sm:$0xff] %vm1132, %v1395
    %1412 = vst.msk [vmem:[#allocation5 + $0xb0] sm:$0xff] %vm1132, %v1396
    %1413 = vst.msk [vmem:[#allocation5 + $0xc0] sm:$0xff] %vm1132, %v1397
    %1414 = vst.msk [vmem:[#allocation5 + $0xd0] sm:$0xff] %vm1132, %v1398
    %1415 = vst.msk [vmem:[#allocation5 + $0xe0] sm:$0xff] %vm1132, %v1399
    %1416 = vst.msk [vmem:[#allocation5 + $0xf0] sm:$0xff] %vm1132, %v1400
    %v1417 = vld [vmem:[#allocation4 + $0x1] sm:$0xff]
    %v1418 = vld [vmem:[#allocation4 + $0x11] sm:$0xff]
    %v1419 = vld [vmem:[#allocation4 + $0x21] sm:$0xff]
    %v1420 = vld [vmem:[#allocation4 + $0x31] sm:$0xff]
    %v1421 = vld [vmem:[#allocation4 + $0x41] sm:$0xff]
    %v1422 = vld [vmem:[#allocation4 + $0x51] sm:$0xff]
    %v1423 = vld [vmem:[#allocation4 + $0x61] sm:$0xff]
    %v1424 = vld [vmem:[#allocation4 + $0x71] sm:$0xff]
    %v1425 = vld [vmem:[#allocation4 + $0xa1] sm:$0xff]
    %v1426 = vld [vmem:[#allocation4 + $0xb1] sm:$0xff]
    %v1427 = vld [vmem:[#allocation4 + $0xc1] sm:$0xff]
    %v1428 = vld [vmem:[#allocation4 + $0xd1] sm:$0xff]
    %v1429 = vld [vmem:[#allocation4 + $0xe1] sm:$0xff]
    %v1430 = vld [vmem:[#allocation4 + $0xf1] sm:$0xff]
    %v1431 = vld [vmem:[#allocation4 + $0x101] sm:$0xff]
    %v1432 = vld [vmem:[#allocation4 + $0x111] sm:$0xff]
    %1449 = vrot.lane.b32.xlu0 %v1417, 16
    %v1450 = vpop.permute.xlu0 %1449
    %1451 = vrot.lane.b32.xlu0 %v1418, 16
    %v1452 = vpop.permute.xlu0 %1451
    %1453 = vrot.lane.b32.xlu0 %v1419, 16
    %v1454 = vpop.permute.xlu0 %1453
    %1455 = vrot.lane.b32.xlu0 %v1420, 16
    %v1456 = vpop.permute.xlu0 %1455
    %1457 = vrot.lane.b32.xlu0 %v1421, 16
    %v1458 = vpop.permute.xlu0 %1457
    %1459 = vrot.lane.b32.xlu0 %v1422, 16
    %v1460 = vpop.permute.xlu0 %1459
    %1461 = vrot.lane.b32.xlu0 %v1423, 16
    %v1462 = vpop.permute.xlu0 %1461
    %1463 = vrot.lane.b32.xlu0 %v1424, 16
    %v1464 = vpop.permute.xlu0 %1463
    %1465 = vrot.lane.b32.xlu0 %v1425, 16
    %v1466 = vpop.permute.xlu0 %1465
    %1467 = vrot.lane.b32.xlu0 %v1426, 16
    %v1468 = vpop.permute.xlu0 %1467
    %1469 = vrot.lane.b32.xlu0 %v1427, 16
    %v1470 = vpop.permute.xlu0 %1469
    %1471 = vrot.lane.b32.xlu0 %v1428, 16
    %v1472 = vpop.permute.xlu0 %1471
    %1473 = vrot.lane.b32.xlu0 %v1429, 16
    %v1474 = vpop.permute.xlu0 %1473
    %1475 = vrot.lane.b32.xlu0 %v1430, 16
    %v1476 = vpop.permute.xlu0 %1475
    %1477 = vrot.lane.b32.xlu0 %v1431, 16
    %v1478 = vpop.permute.xlu0 %1477
    %1479 = vrot.lane.b32.xlu0 %v1432, 16
    %v1480 = vpop.permute.xlu0 %1479
    %vm1497 = vcmask 261248
    %1498 = vst.msk [vmem:[#allocation5] sm:$0xff] %vm1497, %v1450
    %1499 = vst.msk [vmem:[#allocation5 + $0x10] sm:$0xff] %vm1497, %v1452
    %1500 = vst.msk [vmem:[#allocation5 + $0x20] sm:$0xff] %vm1497, %v1454
    %1501 = vst.msk [vmem:[#allocation5 + $0x30] sm:$0xff] %vm1497, %v1456
    %1502 = vst.msk [vmem:[#allocation5 + $0x40] sm:$0xff] %vm1497, %v1458
    %1503 = vst.msk [vmem:[#allocation5 + $0x50] sm:$0xff] %vm1497, %v1460
    %1504 = vst.msk [vmem:[#allocation5 + $0x60] sm:$0xff] %vm1497, %v1462
    %1505 = vst.msk [vmem:[#allocation5 + $0x70] sm:$0xff] %vm1497, %v1464
    %1506 = vst.msk [vmem:[#allocation5 + $0x80] sm:$0xff] %vm1497, %v1466
    %1507 = vst.msk [vmem:[#allocation5 + $0x90] sm:$0xff] %vm1497, %v1468
    %1508 = vst.msk [vmem:[#allocation5 + $0xa0] sm:$0xff] %vm1497, %v1470
    %1509 = vst.msk [vmem:[#allocation5 + $0xb0] sm:$0xff] %vm1497, %v1472
    %1510 = vst.msk [vmem:[#allocation5 + $0xc0] sm:$0xff] %vm1497, %v1474
    %1511 = vst.msk [vmem:[#allocation5 + $0xd0] sm:$0xff] %vm1497, %v1476
    %1512 = vst.msk [vmem:[#allocation5 + $0xe0] sm:$0xff] %vm1497, %v1478
    %1513 = vst.msk [vmem:[#allocation5 + $0xf0] sm:$0xff] %vm1497, %v1480
    %v1514 = vld [vmem:[#allocation4 + $0x2] sm:$0xff]
    %v1515 = vld [vmem:[#allocation4 + $0x12] sm:$0xff]
    %v1516 = vld [vmem:[#allocation4 + $0x22] sm:$0xff]
    %v1517 = vld [vmem:[#allocation4 + $0x32] sm:$0xff]
    %v1518 = vld [vmem:[#allocation4 + $0x42] sm:$0xff]
    %v1519 = vld [vmem:[#allocation4 + $0x52] sm:$0xff]
    %v1520 = vld [vmem:[#allocation4 + $0x62] sm:$0xff]
    %v1521 = vld [vmem:[#allocation4 + $0x72] sm:$0xff]
    %v1522 = vld [vmem:[#allocation4 + $0xa2] sm:$0xff]
    %v1523 = vld [vmem:[#allocation4 + $0xb2] sm:$0xff]
    %v1524 = vld [vmem:[#allocation4 + $0xc2] sm:$0xff]
    %v1525 = vld [vmem:[#allocation4 + $0xd2] sm:$0xff]
    %v1526 = vld [vmem:[#allocation4 + $0xe2] sm:$0xff]
    %v1527 = vld [vmem:[#allocation4 + $0xf2] sm:$0xff]
    %v1528 = vld [vmem:[#allocation4 + $0x102] sm:$0xff]
    %v1529 = vld [vmem:[#allocation4 + $0x112] sm:$0xff]
    %1546 = vrot.lane.b32.xlu0 %v1514, 32
    %v1547 = vpop.permute.xlu0 %1546
    %1548 = vrot.lane.b32.xlu0 %v1515, 32
    %v1549 = vpop.permute.xlu0 %1548
    %1550 = vrot.lane.b32.xlu0 %v1516, 32
    %v1551 = vpop.permute.xlu0 %1550
    %1552 = vrot.lane.b32.xlu0 %v1517, 32
    %v1553 = vpop.permute.xlu0 %1552
    %1554 = vrot.lane.b32.xlu0 %v1518, 32
    %v1555 = vpop.permute.xlu0 %1554
    %1556 = vrot.lane.b32.xlu0 %v1519, 32
    %v1557 = vpop.permute.xlu0 %1556
    %1558 = vrot.lane.b32.xlu0 %v1520, 32
    %v1559 = vpop.permute.xlu0 %1558
    %1560 = vrot.lane.b32.xlu0 %v1521, 32
    %v1561 = vpop.permute.xlu0 %1560
    %1562 = vrot.lane.b32.xlu0 %v1522, 32
    %v1563 = vpop.permute.xlu0 %1562
    %1564 = vrot.lane.b32.xlu0 %v1523, 32
    %v1565 = vpop.permute.xlu0 %1564
    %1566 = vrot.lane.b32.xlu0 %v1524, 32
    %v1567 = vpop.permute.xlu0 %1566
    %1568 = vrot.lane.b32.xlu0 %v1525, 32
    %v1569 = vpop.permute.xlu0 %1568
    %1570 = vrot.lane.b32.xlu0 %v1526, 32
    %v1571 = vpop.permute.xlu0 %1570
    %1572 = vrot.lane.b32.xlu0 %v1527, 32
    %v1573 = vpop.permute.xlu0 %1572
    %1574 = vrot.lane.b32.xlu0 %v1528, 32
    %v1575 = vpop.permute.xlu0 %1574
    %1576 = vrot.lane.b32.xlu0 %v1529, 32
    %v1577 = vpop.permute.xlu0 %1576
    %vm1594 = vcmask 392448
    %1595 = vst.msk [vmem:[#allocation5] sm:$0xff] %vm1594, %v1547
    %1596 = vst.msk [vmem:[#allocation5 + $0x10] sm:$0xff] %vm1594, %v1549
    %1597 = vst.msk [vmem:[#allocation5 + $0x20] sm:$0xff] %vm1594, %v1551
    %1598 = vst.msk [vmem:[#allocation5 + $0x30] sm:$0xff] %vm1594, %v1553
    %1599 = vst.msk [vmem:[#allocation5 + $0x40] sm:$0xff] %vm1594, %v1555
    %1600 = vst.msk [vmem:[#allocation5 + $0x50] sm:$0xff] %vm1594, %v1557
    %1601 = vst.msk [vmem:[#allocation5 + $0x60] sm:$0xff] %vm1594, %v1559
    %1602 = vst.msk [vmem:[#allocation5 + $0x70] sm:$0xff] %vm1594, %v1561
    %1603 = vst.msk [vmem:[#allocation5 + $0x80] sm:$0xff] %vm1594, %v1563
    %1604 = vst.msk [vmem:[#allocation5 + $0x90] sm:$0xff] %vm1594, %v1565
    %1605 = vst.msk [vmem:[#allocation5 + $0xa0] sm:$0xff] %vm1594, %v1567
    %1606 = vst.msk [vmem:[#allocation5 + $0xb0] sm:$0xff] %vm1594, %v1569
    %1607 = vst.msk [vmem:[#allocation5 + $0xc0] sm:$0xff] %vm1594, %v1571
    %1608 = vst.msk [vmem:[#allocation5 + $0xd0] sm:$0xff] %vm1594, %v1573
    %1609 = vst.msk [vmem:[#allocation5 + $0xe0] sm:$0xff] %vm1594, %v1575
    %1610 = vst.msk [vmem:[#allocation5 + $0xf0] sm:$0xff] %vm1594, %v1577
    %v1611 = vld [vmem:[%s1335] sm:$0xff]
    %v1612 = vld [vmem:[%s1335 + $0x10] sm:$0xff]
    %v1613 = vld [vmem:[%s1335 + $0x20] sm:$0xff]
    %v1614 = vld [vmem:[%s1335 + $0x30] sm:$0xff]
    %v1615 = vld [vmem:[%s1335 + $0x40] sm:$0xff]
    %v1616 = vld [vmem:[%s1335 + $0x50] sm:$0xff]
    %v1617 = vld [vmem:[%s1335 + $0x60] sm:$0xff]
    %v1618 = vld [vmem:[%s1335 + $0x70] sm:$0xff]
    %v1619 = vld [vmem:[%s1335 + $0xa0] sm:$0xff]
    %v1620 = vld [vmem:[%s1335 + $0xb0] sm:$0xff]
    %v1621 = vld [vmem:[%s1335 + $0xc0] sm:$0xff]
    %v1622 = vld [vmem:[%s1335 + $0xd0] sm:$0xff]
    %v1623 = vld [vmem:[%s1335 + $0xe0] sm:$0xff]
    %v1624 = vld [vmem:[%s1335 + $0xf0] sm:$0xff]
    %v1625 = vld [vmem:[%s1335 + $0x100] sm:$0xff]
    %v1626 = vld [vmem:[%s1335 + $0x110] sm:$0xff]
    %1643 = vrot.lane.b32.xlu0 %v1611, 48
    %v1644 = vpop.permute.xlu0 %1643
    %1645 = vrot.lane.b32.xlu0 %v1612, 48
    %v1646 = vpop.permute.xlu0 %1645
    %1647 = vrot.lane.b32.xlu0 %v1613, 48
    %v1648 = vpop.permute.xlu0 %1647
    %1649 = vrot.lane.b32.xlu0 %v1614, 48
    %v1650 = vpop.permute.xlu0 %1649
    %1651 = vrot.lane.b32.xlu0 %v1615, 48
    %v1652 = vpop.permute.xlu0 %1651
    %1653 = vrot.lane.b32.xlu0 %v1616, 48
    %v1654 = vpop.permute.xlu0 %1653
    %1655 = vrot.lane.b32.xlu0 %v1617, 48
    %v1656 = vpop.permute.xlu0 %1655
    %1657 = vrot.lane.b32.xlu0 %v1618, 48
    %v1658 = vpop.permute.xlu0 %1657
    %1659 = vrot.lane.b32.xlu0 %v1619, 48
    %v1660 = vpop.permute.xlu0 %1659
    %1661 = vrot.lane.b32.xlu0 %v1620, 48
    %v1662 = vpop.permute.xlu0 %1661
    %1663 = vrot.lane.b32.xlu0 %v1621, 48
    %v1664 = vpop.permute.xlu0 %1663
    %1665 = vrot.lane.b32.xlu0 %v1622, 48
    %v1666 = vpop.permute.xlu0 %1665
    %1667 = vrot.lane.b32.xlu0 %v1623, 48
    %v1668 = vpop.permute.xlu0 %1667
    %1669 = vrot.lane.b32.xlu0 %v1624, 48
    %v1670 = vpop.permute.xlu0 %1669
    %1671 = vrot.lane.b32.xlu0 %v1625, 48
    %v1672 = vpop.permute.xlu0 %1671
    %1673 = vrot.lane.b32.xlu0 %v1626, 48
    %v1674 = vpop.permute.xlu0 %1673
    %vm1691 = vcmask 523648
    %1692 = vst.msk [vmem:[#allocation5] sm:$0xff] %vm1691, %v1644
    %1693 = vst.msk [vmem:[#allocation5 + $0x10] sm:$0xff] %vm1691, %v1646
    %1694 = vst.msk [vmem:[#allocation5 + $0x20] sm:$0xff] %vm1691, %v1648
    %1695 = vst.msk [vmem:[#allocation5 + $0x30] sm:$0xff] %vm1691, %v1650
    %1696 = vst.msk [vmem:[#allocation5 + $0x40] sm:$0xff] %vm1691, %v1652
    %1697 = vst.msk [vmem:[#allocation5 + $0x50] sm:$0xff] %vm1691, %v1654
    %1698 = vst.msk [vmem:[#allocation5 + $0x60] sm:$0xff] %vm1691, %v1656
    %1699 = vst.msk [vmem:[#allocation5 + $0x70] sm:$0xff] %vm1691, %v1658
    %1700 = vst.msk [vmem:[#allocation5 + $0x80] sm:$0xff] %vm1691, %v1660
    %1701 = vst.msk [vmem:[#allocation5 + $0x90] sm:$0xff] %vm1691, %v1662
    %1702 = vst.msk [vmem:[#allocation5 + $0xa0] sm:$0xff] %vm1691, %v1664
    %1703 = vst.msk [vmem:[#allocation5 + $0xb0] sm:$0xff] %vm1691, %v1666
    %1704 = vst.msk [vmem:[#allocation5 + $0xc0] sm:$0xff] %vm1691, %v1668
    %1705 = vst.msk [vmem:[#allocation5 + $0xd0] sm:$0xff] %vm1691, %v1670
    %1706 = vst.msk [vmem:[#allocation5 + $0xe0] sm:$0xff] %vm1691, %v1672
    %1707 = vst.msk [vmem:[#allocation5 + $0xf0] sm:$0xff] %vm1691, %v1674
    %v1708 = vld [vmem:[%s1335 + $0x1] sm:$0xff]
    %v1709 = vld [vmem:[%s1335 + $0x11] sm:$0xff]
    %v1710 = vld [vmem:[%s1335 + $0x21] sm:$0xff]
    %v1711 = vld [vmem:[%s1335 + $0x31] sm:$0xff]
    %v1712 = vld [vmem:[%s1335 + $0x41] sm:$0xff]
    %v1713 = vld [vmem:[%s1335 + $0x51] sm:$0xff]
    %v1714 = vld [vmem:[%s1335 + $0x61] sm:$0xff]
    %v1715 = vld [vmem:[%s1335 + $0x71] sm:$0xff]
    %v1716 = vld [vmem:[%s1335 + $0xa1] sm:$0xff]
    %v1717 = vld [vmem:[%s1335 + $0xb1] sm:$0xff]
    %v1718 = vld [vmem:[%s1335 + $0xc1] sm:$0xff]
    %v1719 = vld [vmem:[%s1335 + $0xd1] sm:$0xff]
    %v1720 = vld [vmem:[%s1335 + $0xe1] sm:$0xff]
    %v1721 = vld [vmem:[%s1335 + $0xf1] sm:$0xff]
    %v1722 = vld [vmem:[%s1335 + $0x101] sm:$0xff]
    %v1723 = vld [vmem:[%s1335 + $0x111] sm:$0xff]
    %1740 = vrot.lane.b32.xlu0 %v1708, 64
    %v1741 = vpop.permute.xlu0 %1740
    %1742 = vrot.lane.b32.xlu0 %v1709, 64
    %v1743 = vpop.permute.xlu0 %1742
    %1744 = vrot.lane.b32.xlu0 %v1710, 64
    %v1745 = vpop.permute.xlu0 %1744
    %1746 = vrot.lane.b32.xlu0 %v1711, 64
    %v1747 = vpop.permute.xlu0 %1746
    %1748 = vrot.lane.b32.xlu0 %v1712, 64
    %v1749 = vpop.permute.xlu0 %1748
    %1750 = vrot.lane.b32.xlu0 %v1713, 64
    %v1751 = vpop.permute.xlu0 %1750
    %1752 = vrot.lane.b32.xlu0 %v1714, 64
    %v1753 = vpop.permute.xlu0 %1752
    %1754 = vrot.lane.b32.xlu0 %v1715, 64
    %v1755 = vpop.permute.xlu0 %1754
    %1756 = vrot.lane.b32.xlu0 %v1716, 64
    %v1757 = vpop.permute.xlu0 %1756
    %1758 = vrot.lane.b32.xlu0 %v1717, 64
    %v1759 = vpop.permute.xlu0 %1758
    %1760 = vrot.lane.b32.xlu0 %v1718, 64
    %v1761 = vpop.permute.xlu0 %1760
    %1762 = vrot.lane.b32.xlu0 %v1719, 64
    %v1763 = vpop.permute.xlu0 %1762
    %1764 = vrot.lane.b32.xlu0 %v1720, 64
    %v1765 = vpop.permute.xlu0 %1764
    %1766 = vrot.lane.b32.xlu0 %v1721, 64
    %v1767 = vpop.permute.xlu0 %1766
    %1768 = vrot.lane.b32.xlu0 %v1722, 64
    %v1769 = vpop.permute.xlu0 %1768
    %1770 = vrot.lane.b32.xlu0 %v1723, 64
    %v1771 = vpop.permute.xlu0 %1770
    %vm1788 = vcmask 654848
    %1789 = vst.msk [vmem:[#allocation5] sm:$0xff] %vm1788, %v1741
    %1790 = vst.msk [vmem:[#allocation5 + $0x10] sm:$0xff] %vm1788, %v1743
    %1791 = vst.msk [vmem:[#allocation5 + $0x20] sm:$0xff] %vm1788, %v1745
    %1792 = vst.msk [vmem:[#allocation5 + $0x30] sm:$0xff] %vm1788, %v1747
    %1793 = vst.msk [vmem:[#allocation5 + $0x40] sm:$0xff] %vm1788, %v1749
    %1794 = vst.msk [vmem:[#allocation5 + $0x50] sm:$0xff] %vm1788, %v1751
    %1795 = vst.msk [vmem:[#allocation5 + $0x60] sm:$0xff] %vm1788, %v1753
    %1796 = vst.msk [vmem:[#allocation5 + $0x70] sm:$0xff] %vm1788, %v1755
    %1797 = vst.msk [vmem:[#allocation5 + $0x80] sm:$0xff] %vm1788, %v1757
    %1798 = vst.msk [vmem:[#allocation5 + $0x90] sm:$0xff] %vm1788, %v1759
    %1799 = vst.msk [vmem:[#allocation5 + $0xa0] sm:$0xff] %vm1788, %v1761
    %1800 = vst.msk [vmem:[#allocation5 + $0xb0] sm:$0xff] %vm1788, %v1763
    %1801 = vst.msk [vmem:[#allocation5 + $0xc0] sm:$0xff] %vm1788, %v1765
    %1802 = vst.msk [vmem:[#allocation5 + $0xd0] sm:$0xff] %vm1788, %v1767
    %1803 = vst.msk [vmem:[#allocation5 + $0xe0] sm:$0xff] %vm1788, %v1769
    %1804 = vst.msk [vmem:[#allocation5 + $0xf0] sm:$0xff] %vm1788, %v1771
    %v1805 = vld [vmem:[%s1335 + $0x2] sm:$0xff]
    %v1806 = vld [vmem:[%s1335 + $0x12] sm:$0xff]
    %v1807 = vld [vmem:[%s1335 + $0x22] sm:$0xff]
    %v1808 = vld [vmem:[%s1335 + $0x32] sm:$0xff]
    %v1809 = vld [vmem:[%s1335 + $0x42] sm:$0xff]
    %v1810 = vld [vmem:[%s1335 + $0x52] sm:$0xff]
    %v1811 = vld [vmem:[%s1335 + $0x62] sm:$0xff]
    %v1812 = vld [vmem:[%s1335 + $0x72] sm:$0xff]
    %v1813 = vld [vmem:[%s1335 + $0xa2] sm:$0xff]
    %v1814 = vld [vmem:[%s1335 + $0xb2] sm:$0xff]
    %v1815 = vld [vmem:[%s1335 + $0xc2] sm:$0xff]
    %v1816 = vld [vmem:[%s1335 + $0xd2] sm:$0xff]
    %v1817 = vld [vmem:[%s1335 + $0xe2] sm:$0xff]
    %v1818 = vld [vmem:[%s1335 + $0xf2] sm:$0xff]
    %v1819 = vld [vmem:[%s1335 + $0x102] sm:$0xff]
    %v1820 = vld [vmem:[%s1335 + $0x112] sm:$0xff]
    %1837 = vrot.lane.b32.xlu0 %v1805, 80
    %v1838 = vpop.permute.xlu0 %1837
    %1839 = vrot.lane.b32.xlu0 %v1806, 80
    %v1840 = vpop.permute.xlu0 %1839
    %1841 = vrot.lane.b32.xlu0 %v1807, 80
    %v1842 = vpop.permute.xlu0 %1841
    %1843 = vrot.lane.b32.xlu0 %v1808, 80
    %v1844 = vpop.permute.xlu0 %1843
    %1845 = vrot.lane.b32.xlu0 %v1809, 80
    %v1846 = vpop.permute.xlu0 %1845
    %1847 = vrot.lane.b32.xlu0 %v1810, 80
    %v1848 = vpop.permute.xlu0 %1847
    %1849 = vrot.lane.b32.xlu0 %v1811, 80
    %v1850 = vpop.permute.xlu0 %1849
    %1851 = vrot.lane.b32.xlu0 %v1812, 80
    %v1852 = vpop.permute.xlu0 %1851
    %1853 = vrot.lane.b32.xlu0 %v1813, 80
    %v1854 = vpop.permute.xlu0 %1853
    %1855 = vrot.lane.b32.xlu0 %v1814, 80
    %v1856 = vpop.permute.xlu0 %1855
    %1857 = vrot.lane.b32.xlu0 %v1815, 80
    %v1858 = vpop.permute.xlu0 %1857
    %1859 = vrot.lane.b32.xlu0 %v1816, 80
    %v1860 = vpop.permute.xlu0 %1859
    %1861 = vrot.lane.b32.xlu0 %v1817, 80
    %v1862 = vpop.permute.xlu0 %1861
    %1863 = vrot.lane.b32.xlu0 %v1818, 80
    %v1864 = vpop.permute.xlu0 %1863
    %1865 = vrot.lane.b32.xlu0 %v1819, 80
    %v1866 = vpop.permute.xlu0 %1865
    %1867 = vrot.lane.b32.xlu0 %v1820, 80
    %v1868 = vpop.permute.xlu0 %1867
    %vm1885 = vcmask 786048
    %1886 = vst.msk [vmem:[#allocation5] sm:$0xff] %vm1885, %v1838
    %1887 = vst.msk [vmem:[#allocation5 + $0x10] sm:$0xff] %vm1885, %v1840
    %1888 = vst.msk [vmem:[#allocation5 + $0x20] sm:$0xff] %vm1885, %v1842
    %1889 = vst.msk [vmem:[#allocation5 + $0x30] sm:$0xff] %vm1885, %v1844
    %1890 = vst.msk [vmem:[#allocation5 + $0x40] sm:$0xff] %vm1885, %v1846
    %1891 = vst.msk [vmem:[#allocation5 + $0x50] sm:$0xff] %vm1885, %v1848
    %1892 = vst.msk [vmem:[#allocation5 + $0x60] sm:$0xff] %vm1885, %v1850
    %1893 = vst.msk [vmem:[#allocation5 + $0x70] sm:$0xff] %vm1885, %v1852
    %1894 = vst.msk [vmem:[#allocation5 + $0x80] sm:$0xff] %vm1885, %v1854
    %1895 = vst.msk [vmem:[#allocation5 + $0x90] sm:$0xff] %vm1885, %v1856
    %1896 = vst.msk [vmem:[#allocation5 + $0xa0] sm:$0xff] %vm1885, %v1858
    %1897 = vst.msk [vmem:[#allocation5 + $0xb0] sm:$0xff] %vm1885, %v1860
    %1898 = vst.msk [vmem:[#allocation5 + $0xc0] sm:$0xff] %vm1885, %v1862
    %1899 = vst.msk [vmem:[#allocation5 + $0xd0] sm:$0xff] %vm1885, %v1864
    %1900 = vst.msk [vmem:[#allocation5 + $0xe0] sm:$0xff] %vm1885, %v1866
    %1901 = vst.msk [vmem:[#allocation5 + $0xf0] sm:$0xff] %vm1885, %v1868
    %s1902 = scalar_lea.vmem [#allocation4], 32
    %v1903 = vld [vmem:[%s1902] sm:$0xff]
    %v1904 = vld [vmem:[%s1902 + $0x10] sm:$0xff]
    %v1905 = vld [vmem:[%s1902 + $0x20] sm:$0xff]
    %v1906 = vld [vmem:[%s1902 + $0x30] sm:$0xff]
    %v1907 = vld [vmem:[%s1902 + $0x40] sm:$0xff]
    %v1908 = vld [vmem:[%s1902 + $0x50] sm:$0xff]
    %v1909 = vld [vmem:[%s1902 + $0x60] sm:$0xff]
    %v1910 = vld [vmem:[%s1902 + $0x70] sm:$0xff]
    %v1911 = vld [vmem:[%s1902 + $0xa0] sm:$0xff]
    %v1912 = vld [vmem:[%s1902 + $0xb0] sm:$0xff]
    %v1913 = vld [vmem:[%s1902 + $0xc0] sm:$0xff]
    %v1914 = vld [vmem:[%s1902 + $0xd0] sm:$0xff]
    %v1915 = vld [vmem:[%s1902 + $0xe0] sm:$0xff]
    %v1916 = vld [vmem:[%s1902 + $0xf0] sm:$0xff]
    %v1917 = vld [vmem:[%s1902 + $0x100] sm:$0xff]
    %v1918 = vld [vmem:[%s1902 + $0x110] sm:$0xff]
    %1935 = vrot.lane.b32.xlu0 %v1903, 96
    %v1936 = vpop.permute.xlu0 %1935
    %1937 = vrot.lane.b32.xlu0 %v1904, 96
    %v1938 = vpop.permute.xlu0 %1937
    %1939 = vrot.lane.b32.xlu0 %v1905, 96
    %v1940 = vpop.permute.xlu0 %1939
    %1941 = vrot.lane.b32.xlu0 %v1906, 96
    %v1942 = vpop.permute.xlu0 %1941
    %1943 = vrot.lane.b32.xlu0 %v1907, 96
    %v1944 = vpop.permute.xlu0 %1943
    %1945 = vrot.lane.b32.xlu0 %v1908, 96
    %v1946 = vpop.permute.xlu0 %1945
    %1947 = vrot.lane.b32.xlu0 %v1909, 96
    %v1948 = vpop.permute.xlu0 %1947
    %1949 = vrot.lane.b32.xlu0 %v1910, 96
    %v1950 = vpop.permute.xlu0 %1949
    %1951 = vrot.lane.b32.xlu0 %v1911, 96
    %v1952 = vpop.permute.xlu0 %1951
    %1953 = vrot.lane.b32.xlu0 %v1912, 96
    %v1954 = vpop.permute.xlu0 %1953
    %1955 = vrot.lane.b32.xlu0 %v1913, 96
    %v1956 = vpop.permute.xlu0 %1955
    %1957 = vrot.lane.b32.xlu0 %v1914, 96
    %v1958 = vpop.permute.xlu0 %1957
    %1959 = vrot.lane.b32.xlu0 %v1915, 96
    %v1960 = vpop.permute.xlu0 %1959
    %1961 = vrot.lane.b32.xlu0 %v1916, 96
    %v1962 = vpop.permute.xlu0 %1961
    %1963 = vrot.lane.b32.xlu0 %v1917, 96
    %v1964 = vpop.permute.xlu0 %1963
    %1965 = vrot.lane.b32.xlu0 %v1918, 96
    %v1966 = vpop.permute.xlu0 %1965
    %vm1983 = vcmask 917248
    %1984 = vst.msk [vmem:[#allocation5] sm:$0xff] %vm1983, %v1936
    %1985 = vst.msk [vmem:[#allocation5 + $0x10] sm:$0xff] %vm1983, %v1938
    %1986 = vst.msk [vmem:[#allocation5 + $0x20] sm:$0xff] %vm1983, %v1940
    %1987 = vst.msk [vmem:[#allocation5 + $0x30] sm:$0xff] %vm1983, %v1942
    %1988 = vst.msk [vmem:[#allocation5 + $0x40] sm:$0xff] %vm1983, %v1944
    %1989 = vst.msk [vmem:[#allocation5 + $0x50] sm:$0xff] %vm1983, %v1946
    %1990 = vst.msk [vmem:[#allocation5 + $0x60] sm:$0xff] %vm1983, %v1948
    %1991 = vst.msk [vmem:[#allocation5 + $0x70] sm:$0xff] %vm1983, %v1950
    %1992 = vst.msk [vmem:[#allocation5 + $0x80] sm:$0xff] %vm1983, %v1952
    %1993 = vst.msk [vmem:[#allocation5 + $0x90] sm:$0xff] %vm1983, %v1954
    %1994 = vst.msk [vmem:[#allocation5 + $0xa0] sm:$0xff] %vm1983, %v1956
    %1995 = vst.msk [vmem:[#allocation5 + $0xb0] sm:$0xff] %vm1983, %v1958
    %1996 = vst.msk [vmem:[#allocation5 + $0xc0] sm:$0xff] %vm1983, %v1960
    %1997 = vst.msk [vmem:[#allocation5 + $0xd0] sm:$0xff] %vm1983, %v1962
    %1998 = vst.msk [vmem:[#allocation5 + $0xe0] sm:$0xff] %vm1983, %v1964
    %1999 = vst.msk [vmem:[#allocation5 + $0xf0] sm:$0xff] %vm1983, %v1966
    %v2000 = vld [vmem:[%s1902 + $0x1] sm:$0xff]
    %v2001 = vld [vmem:[%s1902 + $0x11] sm:$0xff]
    %v2002 = vld [vmem:[%s1902 + $0x21] sm:$0xff]
    %v2003 = vld [vmem:[%s1902 + $0x31] sm:$0xff]
    %v2004 = vld [vmem:[%s1902 + $0x41] sm:$0xff]
    %v2005 = vld [vmem:[%s1902 + $0x51] sm:$0xff]
    %v2006 = vld [vmem:[%s1902 + $0x61] sm:$0xff]
    %v2007 = vld [vmem:[%s1902 + $0x71] sm:$0xff]
    %v2008 = vld [vmem:[%s1902 + $0xa1] sm:$0xff]
    %v2009 = vld [vmem:[%s1902 + $0xb1] sm:$0xff]
    %v2010 = vld [vmem:[%s1902 + $0xc1] sm:$0xff]
    %v2011 = vld [vmem:[%s1902 + $0xd1] sm:$0xff]
    %v2012 = vld [vmem:[%s1902 + $0xe1] sm:$0xff]
    %v2013 = vld [vmem:[%s1902 + $0xf1] sm:$0xff]
    %v2014 = vld [vmem:[%s1902 + $0x101] sm:$0xff]
    %v2015 = vld [vmem:[%s1902 + $0x111] sm:$0xff]
    %2032 = vrot.lane.b32.xlu0 %v2000, 112
    %v2033 = vpop.permute.xlu0 %2032
    %2034 = vrot.lane.b32.xlu0 %v2001, 112
    %v2035 = vpop.permute.xlu0 %2034
    %2036 = vrot.lane.b32.xlu0 %v2002, 112
    %v2037 = vpop.permute.xlu0 %2036
    %2038 = vrot.lane.b32.xlu0 %v2003, 112
    %v2039 = vpop.permute.xlu0 %2038
    %2040 = vrot.lane.b32.xlu0 %v2004, 112
    %v2041 = vpop.permute.xlu0 %2040
    %2042 = vrot.lane.b32.xlu0 %v2005, 112
    %v2043 = vpop.permute.xlu0 %2042
    %2044 = vrot.lane.b32.xlu0 %v2006, 112
    %v2045 = vpop.permute.xlu0 %2044
    %2046 = vrot.lane.b32.xlu0 %v2007, 112
    %v2047 = vpop.permute.xlu0 %2046
    %2048 = vrot.lane.b32.xlu0 %v2008, 112
    %v2049 = vpop.permute.xlu0 %2048
    %2050 = vrot.lane.b32.xlu0 %v2009, 112
    %v2051 = vpop.permute.xlu0 %2050
    %2052 = vrot.lane.b32.xlu0 %v2010, 112
    %v2053 = vpop.permute.xlu0 %2052
    %2054 = vrot.lane.b32.xlu0 %v2011, 112
    %v2055 = vpop.permute.xlu0 %2054
    %2056 = vrot.lane.b32.xlu0 %v2012, 112
    %v2057 = vpop.permute.xlu0 %2056
    %2058 = vrot.lane.b32.xlu0 %v2013, 112
    %v2059 = vpop.permute.xlu0 %2058
    %2060 = vrot.lane.b32.xlu0 %v2014, 112
    %v2061 = vpop.permute.xlu0 %2060
    %2062 = vrot.lane.b32.xlu0 %v2015, 112
    %v2063 = vpop.permute.xlu0 %2062
    %vm2080 = vcmask 1048448
    %2081 = vst.msk [vmem:[#allocation5] sm:$0xff] %vm2080, %v2033
    %2082 = vst.msk [vmem:[#allocation5 + $0x10] sm:$0xff] %vm2080, %v2035
    %2083 = vst.msk [vmem:[#allocation5 + $0x20] sm:$0xff] %vm2080, %v2037
    %2084 = vst.msk [vmem:[#allocation5 + $0x30] sm:$0xff] %vm2080, %v2039
    %2085 = vst.msk [vmem:[#allocation5 + $0x40] sm:$0xff] %vm2080, %v2041
    %2086 = vst.msk [vmem:[#allocation5 + $0x50] sm:$0xff] %vm2080, %v2043
    %2087 = vst.msk [vmem:[#allocation5 + $0x60] sm:$0xff] %vm2080, %v2045
    %2088 = vst.msk [vmem:[#allocation5 + $0x70] sm:$0xff] %vm2080, %v2047
    %2089 = vst.msk [vmem:[#allocation5 + $0x80] sm:$0xff] %vm2080, %v2049
    %2090 = vst.msk [vmem:[#allocation5 + $0x90] sm:$0xff] %vm2080, %v2051
    %2091 = vst.msk [vmem:[#allocation5 + $0xa0] sm:$0xff] %vm2080, %v2053
    %2092 = vst.msk [vmem:[#allocation5 + $0xb0] sm:$0xff] %vm2080, %v2055
    %2093 = vst.msk [vmem:[#allocation5 + $0xc0] sm:$0xff] %vm2080, %v2057
    %2094 = vst.msk [vmem:[#allocation5 + $0xd0] sm:$0xff] %vm2080, %v2059
    %2095 = vst.msk [vmem:[#allocation5 + $0xe0] sm:$0xff] %vm2080, %v2061
    %2096 = vst.msk [vmem:[#allocation5 + $0xf0] sm:$0xff] %vm2080, %v2063
    %v2097 = vld [vmem:[%s1902 + $0x2] sm:$0xff]
    %v2098 = vld [vmem:[%s1902 + $0x12] sm:$0xff]
    %v2099 = vld [vmem:[%s1902 + $0x22] sm:$0xff]
    %v2100 = vld [vmem:[%s1902 + $0x32] sm:$0xff]
    %v2101 = vld [vmem:[%s1902 + $0x42] sm:$0xff]
    %v2102 = vld [vmem:[%s1902 + $0x52] sm:$0xff]
    %v2103 = vld [vmem:[%s1902 + $0x62] sm:$0xff]
    %v2104 = vld [vmem:[%s1902 + $0x72] sm:$0xff]
    %v2105 = vld [vmem:[%s1902 + $0xa2] sm:$0xff]
    %v2106 = vld [vmem:[%s1902 + $0xb2] sm:$0xff]
    %v2107 = vld [vmem:[%s1902 + $0xc2] sm:$0xff]
    %v2108 = vld [vmem:[%s1902 + $0xd2] sm:$0xff]
    %v2109 = vld [vmem:[%s1902 + $0xe2] sm:$0xff]
    %v2110 = vld [vmem:[%s1902 + $0xf2] sm:$0xff]
    %v2111 = vld [vmem:[%s1902 + $0x102] sm:$0xff]
    %v2112 = vld [vmem:[%s1902 + $0x112] sm:$0xff]
    %2113 = vst.msk [vmem:[#allocation5 + $0x8] sm:$0xff] %vm1132, %v2097
    %2114 = vst.msk [vmem:[#allocation5 + $0x18] sm:$0xff] %vm1132, %v2098
    %2115 = vst.msk [vmem:[#allocation5 + $0x28] sm:$0xff] %vm1132, %v2099
    %2116 = vst.msk [vmem:[#allocation5 + $0x38] sm:$0xff] %vm1132, %v2100
    %2117 = vst.msk [vmem:[#allocation5 + $0x48] sm:$0xff] %vm1132, %v2101
    %2118 = vst.msk [vmem:[#allocation5 + $0x58] sm:$0xff] %vm1132, %v2102
    %2119 = vst.msk [vmem:[#allocation5 + $0x68] sm:$0xff] %vm1132, %v2103
    %2120 = vst.msk [vmem:[#allocation5 + $0x78] sm:$0xff] %vm1132, %v2104
    %2121 = vst.msk [vmem:[#allocation5 + $0x88] sm:$0xff] %vm1132, %v2105
    %2122 = vst.msk [vmem:[#allocation5 + $0x98] sm:$0xff] %vm1132, %v2106
    %2123 = vst.msk [vmem:[#allocation5 + $0xa8] sm:$0xff] %vm1132, %v2107
    %2124 = vst.msk [vmem:[#allocation5 + $0xb8] sm:$0xff] %vm1132, %v2108
    %2125 = vst.msk [vmem:[#allocation5 + $0xc8] sm:$0xff] %vm1132, %v2109
    %2126 = vst.msk [vmem:[#allocation5 + $0xd8] sm:$0xff] %vm1132, %v2110
    %2127 = vst.msk [vmem:[#allocation5 + $0xe8] sm:$0xff] %vm1132, %v2111
    %2128 = vst.msk [vmem:[#allocation5 + $0xf8] sm:$0xff] %vm1132, %v2112
    %v2129 = vld [vmem:[#allocation5] sm:$0xff]
    %v2130 = vld [vmem:[#allocation5 + $0x8] sm:$0xff]
    %v2131 = vld [vmem:[#allocation5 + $0x10] sm:$0xff]
    %v2132 = vld [vmem:[#allocation5 + $0x18] sm:$0xff]
    %v2133 = vld [vmem:[#allocation5 + $0x20] sm:$0xff]
    %v2134 = vld [vmem:[#allocation5 + $0x28] sm:$0xff]
    %v2135 = vld [vmem:[#allocation5 + $0x30] sm:$0xff]
    %v2136 = vld [vmem:[#allocation5 + $0x38] sm:$0xff]
    %v2137 = vld [vmem:[#allocation5 + $0x40] sm:$0xff]
    %v2138 = vld [vmem:[#allocation5 + $0x48] sm:$0xff]
    %v2139 = vld [vmem:[#allocation5 + $0x50] sm:$0xff]
    %v2140 = vld [vmem:[#allocation5 + $0x58] sm:$0xff]
    %v2141 = vld [vmem:[#allocation5 + $0x60] sm:$0xff]
    %v2142 = vld [vmem:[#allocation5 + $0x68] sm:$0xff]
    %v2143 = vld [vmem:[#allocation5 + $0x70] sm:$0xff]
    %v2144 = vld [vmem:[#allocation5 + $0x78] sm:$0xff]
    %v2145 = vld [vmem:[#allocation5 + $0x80] sm:$0xff]
    %v2146 = vld [vmem:[#allocation5 + $0x88] sm:$0xff]
    %v2147 = vld [vmem:[#allocation5 + $0x90] sm:$0xff]
    %v2148 = vld [vmem:[#allocation5 + $0x98] sm:$0xff]
    %v2149 = vld [vmem:[#allocation5 + $0xa0] sm:$0xff]
    %v2150 = vld [vmem:[#allocation5 + $0xa8] sm:$0xff]
    %v2151 = vld [vmem:[#allocation5 + $0xb0] sm:$0xff]
    %v2152 = vld [vmem:[#allocation5 + $0xb8] sm:$0xff]
    %v2153 = vld [vmem:[#allocation5 + $0xc0] sm:$0xff]
    %v2154 = vld [vmem:[#allocation5 + $0xc8] sm:$0xff]
    %v2155 = vld [vmem:[#allocation5 + $0xd0] sm:$0xff]
    %v2156 = vld [vmem:[#allocation5 + $0xd8] sm:$0xff]
    %v2157 = vld [vmem:[#allocation5 + $0xe0] sm:$0xff]
    %v2158 = vld [vmem:[#allocation5 + $0xe8] sm:$0xff]
    %v2159 = vld [vmem:[#allocation5 + $0xf0] sm:$0xff]
    %v2160 = vld [vmem:[#allocation5 + $0xf8] sm:$0xff]
    %v2161 = vld [vmem:[%s4] sm:$0xff]
    %v2162 = vld [vmem:[%s4 + $0x8] sm:$0xff]
    %v2163 = vld [vmem:[%s4 + $0x10] sm:$0xff]
    %v2164 = vld [vmem:[%s4 + $0x18] sm:$0xff]
    %v2165 = vld [vmem:[%s4 + $0x20] sm:$0xff]
    %v2166 = vld [vmem:[%s4 + $0x28] sm:$0xff]
    %v2167 = vld [vmem:[%s4 + $0x30] sm:$0xff]
    %v2168 = vld [vmem:[%s4 + $0x38] sm:$0xff]
    %v2169 = vld [vmem:[%s4 + $0x40] sm:$0xff]
    %v2170 = vld [vmem:[%s4 + $0x48] sm:$0xff]
    %v2171 = vld [vmem:[%s4 + $0x50] sm:$0xff]
    %v2172 = vld [vmem:[%s4 + $0x58] sm:$0xff]
    %v2173 = vld [vmem:[%s4 + $0x60] sm:$0xff]
    %v2174 = vld [vmem:[%s4 + $0x68] sm:$0xff]
    %v2175 = vld [vmem:[%s4 + $0x70] sm:$0xff]
    %v2176 = vld [vmem:[%s4 + $0x78] sm:$0xff]
    %v2177 = vld [vmem:[%s4 + $0x80] sm:$0xff]
    %v2178 = vld [vmem:[%s4 + $0x88] sm:$0xff]
    %v2180 = vsel %vm1132, %v2130, 0
    %v2183 = vsel %vm1132, %v2132, 0
    %v2186 = vsel %vm1132, %v2134, 0
    %v2189 = vsel %vm1132, %v2136, 0
    %v2192 = vsel %vm1132, %v2138, 0
    %v2195 = vsel %vm1132, %v2140, 0
    %v2198 = vsel %vm1132, %v2142, 0
    %v2201 = vsel %vm1132, %v2144, 0
    %v2204 = vsel %vm1132, %v2146, 0
    %v2207 = vsel %vm1132, %v2148, 0
    %v2210 = vsel %vm1132, %v2150, 0
    %v2213 = vsel %vm1132, %v2152, 0
    %v2216 = vsel %vm1132, %v2154, 0
    %v2219 = vsel %vm1132, %v2156, 0
    %v2222 = vsel %vm1132, %v2158, 0
    %v2225 = vsel %vm1132, %v2160, 0
    %2227 = vmatprep.subr.mxu0 0.0
    %2228 = vmatpush1.msra.mxu0 %v2176
    %2229 = vmatprep.subr.mxu0 0.0
    %2230 = vmatpush1.msra.mxu0 %v2175
    %2231 = vmatprep.subr.mxu0 0.0
    %2232 = vmatpush1.msra.mxu0 %v2174
    %2233 = vmatprep.subr.mxu0 0.0
    %2234 = vmatpush1.msra.mxu0 %v2173
    %2235 = vmatprep.subr.mxu0 0.0
    %2236 = vmatpush1.msra.mxu0 %v2172
    %2237 = vmatprep.subr.mxu0 0.0
    %2238 = vmatpush1.msra.mxu0 %v2171
    %2239 = vmatprep.subr.mxu0 0.0
    %2240 = vmatpush1.msra.mxu0 %v2170
    %2241 = vmatprep.subr.mxu0 0.0
    %2242 = vmatpush1.msra.mxu0 %v2169
    %2243 = vmatprep.subr.mxu0 0.0
    %2244 = vmatpush1.msra.mxu0 %v2168
    %2245 = vmatprep.subr.mxu0 0.0
    %2246 = vmatpush1.msra.mxu0 %v2167
    %2247 = vmatprep.subr.mxu0 0.0
    %2248 = vmatpush1.msra.mxu0 %v2166
    %2249 = vmatprep.subr.mxu0 0.0
    %2250 = vmatpush1.msra.mxu0 %v2165
    %2251 = vmatprep.subr.mxu0 0.0
    %2252 = vmatpush1.msra.mxu0 %v2164
    %2253 = vmatprep.subr.mxu0 0.0
    %2254 = vmatpush1.msra.mxu0 %v2163
    %2255 = vmatprep.subr.mxu0 0.0
    %2256 = vmatpush1.msra.mxu0 %v2162
    %2257 = vmatprep.subr.mxu0 0.0
    %2258 = vmatpush1.msra.mxu0 %v2161
    %2259 = vmatprep.subr.mxu0 0.0
    %2260 = vmatpush2.msra.mxu0 0.0
    %2261 = vmatprep.subr.mxu0 0.0
    %2262 = vmatpush2.msra.mxu0 0.0
    %2263 = vmatprep.subr.mxu0 0.0
    %2264 = vmatpush2.msra.mxu0 0.0
    %2265 = vmatprep.subr.mxu0 0.0
    %2266 = vmatpush2.msra.mxu0 0.0
    %2267 = vmatprep.subr.mxu0 0.0
    %2268 = vmatpush2.msra.mxu0 0.0
    %2269 = vmatprep.subr.mxu0 0.0
    %2270 = vmatpush2.msra.mxu0 0.0
    %2271 = vmatprep.subr.mxu0 0.0
    %2272 = vmatpush2.msra.mxu0 0.0
    %2273 = vmatprep.subr.mxu0 0.0
    %2274 = vmatpush2.msra.mxu0 0.0
    %2275 = vmatprep.subr.mxu0 0.0
    %2276 = vmatpush2.msra.mxu0 0.0
    %2277 = vmatprep.subr.mxu0 0.0
    %2278 = vmatpush2.msra.mxu0 0.0
    %2279 = vmatprep.subr.mxu0 0.0
    %2280 = vmatpush2.msra.mxu0 0.0
    %2281 = vmatprep.subr.mxu0 0.0
    %2282 = vmatpush2.msra.mxu0 0.0
    %2283 = vmatprep.subr.mxu0 0.0
    %2284 = vmatpush2.msra.mxu0 0.0
    %2285 = vmatprep.subr.mxu0 0.0
    %2286 = vmatpush2.msra.mxu0 0.0
    %2287 = vmatprep.subr.mxu0 0.0
    %2288 = vmatpush2.msra.mxu0 %v2178
    %2289 = vmatprep.subr.mxu0 0.0
    %2290 = vmatpush2.msra.mxu0 %v2177
    %2291 = vmatprep.mubr.f32.mxu0 %v2180
    %2292 = vmatmul.mubr.f32.gmra.mxu0 %v2129
    %v2293 = vpop.f32.mrf.mxu0
    %v2294 = vadd.f32 0.0, %v2293
    %v2295 = vpop.f32.mrf.mxu0
    %2296 = vmatprep.mubr.f32.mxu0 %v2183
    %2297 = vmatmul.mubr.f32.gmra.mxu0 %v2131
    %v2298 = vpop.f32.mrf.mxu0
    %v2299 = vadd.f32 0.0, %v2298
    %v2300 = vpop.f32.mrf.mxu0
    %2301 = vmatprep.mubr.f32.mxu0 %v2186
    %2302 = vmatmul.mubr.f32.gmra.mxu0 %v2133
    %v2303 = vpop.f32.mrf.mxu0
    %v2304 = vadd.f32 0.0, %v2303
    %v2305 = vpop.f32.mrf.mxu0
    %2306 = vmatprep.mubr.f32.mxu0 %v2189
    %2307 = vmatmul.mubr.f32.gmra.mxu0 %v2135
    %v2308 = vpop.f32.mrf.mxu0
    %v2309 = vadd.f32 0.0, %v2308
    %v2310 = vpop.f32.mrf.mxu0
    %2311 = vmatprep.mubr.f32.mxu0 %v2192
    %2312 = vmatmul.mubr.f32.gmra.mxu0 %v2137
    %v2313 = vpop.f32.mrf.mxu0
    %v2314 = vadd.f32 0.0, %v2313
    %v2315 = vpop.f32.mrf.mxu0
    %2316 = vmatprep.mubr.f32.mxu0 %v2195
    %2317 = vmatmul.mubr.f32.gmra.mxu0 %v2139
    %v2318 = vpop.f32.mrf.mxu0
    %v2319 = vadd.f32 0.0, %v2318
    %v2320 = vpop.f32.mrf.mxu0
    %2321 = vmatprep.mubr.f32.mxu0 %v2198
    %2322 = vmatmul.mubr.f32.gmra.mxu0 %v2141
    %v2323 = vpop.f32.mrf.mxu0
    %v2324 = vadd.f32 0.0, %v2323
    %v2325 = vpop.f32.mrf.mxu0
    %2326 = vmatprep.mubr.f32.mxu0 %v2201
    %2327 = vmatmul.mubr.f32.gmra.mxu0 %v2143
    %v2328 = vpop.f32.mrf.mxu0
    %v2329 = vadd.f32 0.0, %v2328
    %v2330 = vpop.f32.mrf.mxu0
    %2331 = vmatprep.mubr.f32.mxu0 %v2204
    %2332 = vmatmul.mubr.f32.gmra.mxu0 %v2145
    %v2333 = vpop.f32.mrf.mxu0
    %v2334 = vadd.f32 0.0, %v2333
    %v2335 = vpop.f32.mrf.mxu0
    %2336 = vmatprep.mubr.f32.mxu0 %v2207
    %2337 = vmatmul.mubr.f32.gmra.mxu0 %v2147
    %v2338 = vpop.f32.mrf.mxu0
    %v2339 = vadd.f32 0.0, %v2338
    %v2340 = vpop.f32.mrf.mxu0
    %2341 = vmatprep.mubr.f32.mxu0 %v2210
    %2342 = vmatmul.mubr.f32.gmra.mxu0 %v2149
    %v2343 = vpop.f32.mrf.mxu0
    %v2344 = vadd.f32 0.0, %v2343
    %v2345 = vpop.f32.mrf.mxu0
    %2346 = vmatprep.mubr.f32.mxu0 %v2213
    %2347 = vmatmul.mubr.f32.gmra.mxu0 %v2151
    %v2348 = vpop.f32.mrf.mxu0
    %v2349 = vadd.f32 0.0, %v2348
    %v2350 = vpop.f32.mrf.mxu0
    %2351 = vmatprep.mubr.f32.mxu0 %v2216
    %2352 = vmatmul.mubr.f32.gmra.mxu0 %v2153
    %v2353 = vpop.f32.mrf.mxu0
    %v2354 = vadd.f32 0.0, %v2353
    %v2355 = vpop.f32.mrf.mxu0
    %2356 = vmatprep.mubr.f32.mxu0 %v2219
    %2357 = vmatmul.mubr.f32.gmra.mxu0 %v2155
    %v2358 = vpop.f32.mrf.mxu0
    %v2359 = vadd.f32 0.0, %v2358
    %v2360 = vpop.f32.mrf.mxu0
    %2361 = vmatprep.mubr.f32.mxu0 %v2222
    %2362 = vmatmul.mubr.f32.gmra.mxu0 %v2157
    %v2363 = vpop.f32.mrf.mxu0
    %v2364 = vadd.f32 0.0, %v2363
    %v2365 = vpop.f32.mrf.mxu0
    %2366 = vmatprep.mubr.f32.mxu0 %v2225
    %2367 = vmatmul.mubr.f32.gmra.mxu0 %v2159
    %v2368 = vpop.f32.mrf.mxu0
    %v2369 = vadd.f32 0.0, %v2368
    %v2370 = vpop.f32.mrf.mxu0
    %2371 = vdwg.mxu0
    %v2372 = vsel %vm1132, %v2294, 0.0
    %v2373 = vsel %vm1132, %v2299, 0.0
    %v2374 = vadd.f32 %v2372, %v2373
    %v2375 = vsel %vm1132, %v2304, 0.0
    %v2376 = vadd.f32 %v2374, %v2375
    %v2377 = vsel %vm1132, %v2309, 0.0
    %v2378 = vadd.f32 %v2376, %v2377
    %v2379 = vsel %vm1132, %v2314, 0.0
    %v2380 = vadd.f32 %v2378, %v2379
    %v2381 = vsel %vm1132, %v2319, 0.0
    %v2382 = vadd.f32 %v2380, %v2381
    %v2383 = vsel %vm1132, %v2324, 0.0
    %v2384 = vadd.f32 %v2382, %v2383
    %v2385 = vsel %vm1132, %v2329, 0.0
    %v2386 = vadd.f32 %v2384, %v2385
    %v2387 = vsel %vm1132, %v2334, 0.0
    %v2388 = vadd.f32 %v2386, %v2387
    %v2389 = vsel %vm1132, %v2339, 0.0
    %v2390 = vadd.f32 %v2388, %v2389
    %v2391 = vsel %vm1132, %v2344, 0.0
    %v2392 = vadd.f32 %v2390, %v2391
    %v2393 = vsel %vm1132, %v2349, 0.0
    %v2394 = vadd.f32 %v2392, %v2393
    %v2395 = vsel %vm1132, %v2354, 0.0
    %v2396 = vadd.f32 %v2394, %v2395
    %v2397 = vsel %vm1132, %v2359, 0.0
    %v2398 = vadd.f32 %v2396, %v2397
    %v2399 = vsel %vm1132, %v2364, 0.0
    %v2400 = vadd.f32 %v2398, %v2399
    %v2401 = vsel %vm1132, %v2369, 0.0
    %v2402 = vadd.f32 %v2400, %v2401
    %v2403 = vrot.slane %v2402, 4
    %v2404 = vadd.f32 %v2402, %v2403
    %v2405 = vrot.slane %v2404, 2
    %v2406 = vadd.f32 %v2404, %v2405
    %v2407 = vrot.slane %v2406, 1
    %v2408 = vadd.f32 %v2406, %v2407
    %v2409 = vmul.f32 %v2408, %v1170
    %v2410 = vsub.f32 %v2294, %v2409
    %v2411 = vsub.f32 %v2299, %v2409
    %v2412 = vsub.f32 %v2304, %v2409
    %v2413 = vsub.f32 %v2309, %v2409
    %v2414 = vsub.f32 %v2314, %v2409
    %v2415 = vsub.f32 %v2319, %v2409
    %v2416 = vsub.f32 %v2324, %v2409
    %v2417 = vsub.f32 %v2329, %v2409
    %v2418 = vsub.f32 %v2334, %v2409
    %v2419 = vsub.f32 %v2339, %v2409
    %v2420 = vsub.f32 %v2344, %v2409
    %v2421 = vsub.f32 %v2349, %v2409
    %v2422 = vsub.f32 %v2354, %v2409
    %v2423 = vsub.f32 %v2359, %v2409
    %v2424 = vsub.f32 %v2364, %v2409
    %v2425 = vsub.f32 %v2369, %v2409
    %v2426 = vmul.f32 %v2410, %v2410
    %v2427 = vmul.f32 %v2411, %v2411
    %v2428 = vmul.f32 %v2412, %v2412
    %v2429 = vmul.f32 %v2413, %v2413
    %v2430 = vmul.f32 %v2414, %v2414
    %v2431 = vmul.f32 %v2415, %v2415
    %v2432 = vmul.f32 %v2416, %v2416
    %v2433 = vmul.f32 %v2417, %v2417
    %v2434 = vmul.f32 %v2418, %v2418
    %v2435 = vmul.f32 %v2419, %v2419
    %v2436 = vmul.f32 %v2420, %v2420
    %v2437 = vmul.f32 %v2421, %v2421
    %v2438 = vmul.f32 %v2422, %v2422
    %v2439 = vmul.f32 %v2423, %v2423
    %v2440 = vmul.f32 %v2424, %v2424
    %v2441 = vmul.f32 %v2425, %v2425
    %v2442 = vsel %vm1132, %v2426, 0.0
    %v2443 = vsel %vm1132, %v2427, 0.0
    %v2444 = vadd.f32 %v2442, %v2443
    %v2445 = vsel %vm1132, %v2428, 0.0
    %v2446 = vadd.f32 %v2444, %v2445
    %v2447 = vsel %vm1132, %v2429, 0.0
    %v2448 = vadd.f32 %v2446, %v2447
    %v2449 = vsel %vm1132, %v2430, 0.0
    %v2450 = vadd.f32 %v2448, %v2449
    %v2451 = vsel %vm1132, %v2431, 0.0
    %v2452 = vadd.f32 %v2450, %v2451
    %v2453 = vsel %vm1132, %v2432, 0.0
    %v2454 = vadd.f32 %v2452, %v2453
    %v2455 = vsel %vm1132, %v2433, 0.0
    %v2456 = vadd.f32 %v2454, %v2455
    %v2457 = vsel %vm1132, %v2434, 0.0
    %v2458 = vadd.f32 %v2456, %v2457
    %v2459 = vsel %vm1132, %v2435, 0.0
    %v2460 = vadd.f32 %v2458, %v2459
    %v2461 = vsel %vm1132, %v2436, 0.0
    %v2462 = vadd.f32 %v2460, %v2461
    %v2463 = vsel %vm1132, %v2437, 0.0
    %v2464 = vadd.f32 %v2462, %v2463
    %v2465 = vsel %vm1132, %v2438, 0.0
    %v2466 = vadd.f32 %v2464, %v2465
    %v2467 = vsel %vm1132, %v2439, 0.0
    %v2468 = vadd.f32 %v2466, %v2467
    %v2469 = vsel %vm1132, %v2440, 0.0
    %v2470 = vadd.f32 %v2468, %v2469
    %v2471 = vsel %vm1132, %v2441, 0.0
    %v2472 = vadd.f32 %v2470, %v2471
    %v2473 = vrot.slane %v2472, 4
    %v2474 = vadd.f32 %v2472, %v2473
    %v2475 = vrot.slane %v2474, 2
    %v2476 = vadd.f32 %v2474, %v2475
    %v2477 = vrot.slane %v2476, 1
    %v2478 = vadd.f32 %v2476, %v2477
    %v2479 = vmul.f32 %v2478, %v1170
    %v2480 = vld [vmem:[%s5] sm:$0x1]
    %v2481 = vadd.f32 %v2479, 1e-05
    %v2482 = vrsqrt.pop %v2481
    %v2483 = vmul.f32 %v2480, %v2482
    %v2484 = vld [vmem:[%s6] sm:$0x1]
    %v2485 = vmul.f32 %v2409, %v2483
    %v2486 = vsub.f32 %v2484, %v2485
    %v2488 = vlaneseq
    %v2489 = vshrl.u32 %v2488, 7
    %v2490 = vsub.s32 0, %v2489
    %v2491 = vrot.slane %v2483, %v2490
    %v2493 = vmul.f32 %v2294, %v2491
    %v2494 = vmul.f32 %v2299, %v2491
    %v2495 = vmul.f32 %v2304, %v2491
    %v2496 = vmul.f32 %v2309, %v2491
    %v2497 = vmul.f32 %v2314, %v2491
    %v2498 = vmul.f32 %v2319, %v2491
    %v2499 = vmul.f32 %v2324, %v2491
    %v2500 = vmul.f32 %v2329, %v2491
    %v2501 = vmul.f32 %v2334, %v2491
    %v2502 = vmul.f32 %v2339, %v2491
    %v2503 = vmul.f32 %v2344, %v2491
    %v2504 = vmul.f32 %v2349, %v2491
    %v2505 = vmul.f32 %v2354, %v2491
    %v2506 = vmul.f32 %v2359, %v2491
    %v2507 = vmul.f32 %v2364, %v2491
    %v2508 = vmul.f32 %v2369, %v2491
    %v2510 = vlaneseq
    %v2511 = vshrl.u32 %v2510, 7
    %v2512 = vsub.s32 0, %v2511
    %v2513 = vrot.slane %v2486, %v2512
    %v2515 = vadd.f32 %v2493, %v2513
    %v2516 = vadd.f32 %v2494, %v2513
    %v2517 = vadd.f32 %v2495, %v2513
    %v2518 = vadd.f32 %v2496, %v2513
    %v2519 = vadd.f32 %v2497, %v2513
    %v2520 = vadd.f32 %v2498, %v2513
    %v2521 = vadd.f32 %v2499, %v2513
    %v2522 = vadd.f32 %v2500, %v2513
    %v2523 = vadd.f32 %v2501, %v2513
    %v2524 = vadd.f32 %v2502, %v2513
    %v2525 = vadd.f32 %v2503, %v2513
    %v2526 = vadd.f32 %v2504, %v2513
    %v2527 = vadd.f32 %v2505, %v2513
    %v2528 = vadd.f32 %v2506, %v2513
    %v2529 = vadd.f32 %v2507, %v2513
    %v2530 = vadd.f32 %v2508, %v2513
    %v2531 = vmul.f32 %v2515, 0.2
    %v2532 = vmul.f32 %v2516, 0.2
    %v2533 = vmul.f32 %v2517, 0.2
    %v2534 = vmul.f32 %v2518, 0.2
    %v2535 = vmul.f32 %v2519, 0.2
    %v2536 = vmul.f32 %v2520, 0.2
    %v2537 = vmul.f32 %v2521, 0.2
    %v2538 = vmul.f32 %v2522, 0.2
    %v2539 = vmul.f32 %v2523, 0.2
    %v2540 = vmul.f32 %v2524, 0.2
    %v2541 = vmul.f32 %v2525, 0.2
    %v2542 = vmul.f32 %v2526, 0.2
    %v2543 = vmul.f32 %v2527, 0.2
    %v2544 = vmul.f32 %v2528, 0.2
    %v2545 = vmul.f32 %v2529, 0.2
    %v2546 = vmul.f32 %v2530, 0.2
    %v2547 = vmax.f32 %v2515, %v2531
    %v2548 = vmax.f32 %v2516, %v2532
    %v2549 = vmax.f32 %v2517, %v2533
    %v2550 = vmax.f32 %v2518, %v2534
    %v2551 = vmax.f32 %v2519, %v2535
    %v2552 = vmax.f32 %v2520, %v2536
    %v2553 = vmax.f32 %v2521, %v2537
    %v2554 = vmax.f32 %v2522, %v2538
    %v2555 = vmax.f32 %v2523, %v2539
    %v2556 = vmax.f32 %v2524, %v2540
    %v2557 = vmax.f32 %v2525, %v2541
    %v2558 = vmax.f32 %v2526, %v2542
    %v2559 = vmax.f32 %v2527, %v2543
    %v2560 = vmax.f32 %v2528, %v2544
    %v2561 = vmax.f32 %v2529, %v2545
    %v2562 = vmax.f32 %v2530, %v2546
    %2563 = vst.msk [vmem:[#allocation6] sm:$0xff] %vm1132, %v2547
    %2564 = vst.msk [vmem:[#allocation6 + $0x8] sm:$0xff] %vm1132, %v2548
    %2565 = vst.msk [vmem:[#allocation6 + $0x10] sm:$0xff] %vm1132, %v2549
    %2566 = vst.msk [vmem:[#allocation6 + $0x18] sm:$0xff] %vm1132, %v2550
    %2567 = vst.msk [vmem:[#allocation6 + $0x20] sm:$0xff] %vm1132, %v2551
    %2568 = vst.msk [vmem:[#allocation6 + $0x28] sm:$0xff] %vm1132, %v2552
    %2569 = vst.msk [vmem:[#allocation6 + $0x30] sm:$0xff] %vm1132, %v2553
    %2570 = vst.msk [vmem:[#allocation6 + $0x38] sm:$0xff] %vm1132, %v2554
    %2571 = vst.msk [vmem:[#allocation6 + $0x40] sm:$0xff] %vm1132, %v2555
    %2572 = vst.msk [vmem:[#allocation6 + $0x48] sm:$0xff] %vm1132, %v2556
    %2573 = vst.msk [vmem:[#allocation6 + $0x50] sm:$0xff] %vm1132, %v2557
    %2574 = vst.msk [vmem:[#allocation6 + $0x58] sm:$0xff] %vm1132, %v2558
    %2575 = vst.msk [vmem:[#allocation6 + $0x60] sm:$0xff] %vm1132, %v2559
    %2576 = vst.msk [vmem:[#allocation6 + $0x68] sm:$0xff] %vm1132, %v2560
    %2577 = vst.msk [vmem:[#allocation6 + $0x70] sm:$0xff] %vm1132, %v2561
    %2578 = vst.msk [vmem:[#allocation6 + $0x78] sm:$0xff] %vm1132, %v2562
    // Predicated region
    $region30: #{sepdown_forward.1} parent=1 // pred_check
      _
    $region31: #{sepdown_forward.1} parent=1 // pred_check_branch
      %2580 = sbr.rel (0) target = $region33
    $region32: #{sepdown_forward.1} parent=1 // pred_region
      %s2582 = ssub.s32 2048, 2048
      %2583 = vsyncadd [#allocation7], %s2582
      %s2584 = sshll.u32 [#allocation6], 4
      %s2585 = int_to_ptr.vmem [resolvable:$true] %s2584
      %2590 = dma.vmem_to_hbm [thread:$0]  %s2585, 2048, %s7, [#allocation7], 128, 128, 8
    $region33: #{sepdown_forward.1} parent=1 // pred_fallthru
      _
    // Predicated region
    $region34: #{sepdown_forward.1} parent=1 // pred_check
      _
    $region35: #{sepdown_forward.1} parent=1 // pred_check_branch
      %2592 = sbr.rel (0) target = $region37
    $region36: #{sepdown_forward.1} parent=1 // pred_region
      %2593 = dma.done [#allocation7], 2048
    $region37: #{sepdown_forward.1} parent=1 // pred_fallthru
      _
    %2594 = vsyncpa [#allocation7], 1

</llo_original>
